<compile_context>
chip_gen: v7x
topology: tpu7x:2x2x1
jax: 0.10.0
libtpu: 0.0.40
codegen_flags: <defaults>
</compile_context>

<pallas_src>
import math
import functools
import jax
import jax.numpy as jnp
from jax import lax
from jax.experimental import pallas as pl
from jax.experimental.pallas import tpu as pltpu


def _pick_q_tile(sq, target=256):
    """Largest query tile <= target that divides Sq and is a multiple of 8
    (or the full Sq, which is always a legal block)."""
    if sq <= target:
        return sq
    for t in range(target, 7, -1):
        if sq % t == 0 and t % 8 == 0:
            return t
    return sq


def _pick_heads_per_block(head_size, d, max_lanes=512):
    """Heads per grid step: all heads if the projection width fits the lane
    budget, otherwise the largest divisor of head_size whose width is a
    multiple of 128 (lane-aligned weight column slices)."""
    if head_size * d <= max_lanes:
        return head_size
    for hb in range(head_size, 0, -1):
        if head_size % hb == 0 and hb * d <= max_lanes and (hb * d) % 128 == 0:
            return hb
    return head_size


def _mha_kernel(*refs, scale, d, hb, head_size, has_bias, bias_h_is_one):
    if has_bias:
        (q_ref, k_ref, v_ref, bias_ref, wq_ref, bq_ref, wk_ref, bk_ref,
         wv_ref, bv_ref, wo_ref, bo_ref, o_ref, ctx_ref) = refs
    else:
        (q_ref, k_ref, v_ref, wq_ref, bq_ref, wk_ref, bk_ref,
         wv_ref, bv_ref, wo_ref, bo_ref, o_ref, ctx_ref) = refs
        bias_ref = None

    hblk = pl.program_id(2)
    n_hblk = pl.num_programs(2)

    q = q_ref[0]                    # (tq, H)
    k = k_ref[0]                    # (Sk, H)
    v = v_ref[0]                    # (Sk, H)
    in_dtype = q.dtype

    # Lane-dense per-head-block projections: native-dtype MXU feeds, f32 acc.
    qh = jnp.dot(q, wq_ref[...], preferred_element_type=jnp.float32) + bq_ref[...]
    kh = jnp.dot(k, wk_ref[...], preferred_element_type=jnp.float32) + bk_ref[...]
    vh = jnp.dot(v, wv_ref[...], preferred_element_type=jnp.float32) + bv_ref[...]
    qh = qh * scale                 # module scales q before the score matmul

    pieces = []
    for j in range(hb):             # static loop over heads in this block
        sl = slice(j * d, (j + 1) * d)
        qj = qh[:, sl].astype(in_dtype)
        kj = kh[:, sl].astype(in_dtype)
        vj = vh[:, sl].astype(in_dtype)
        # scores (tq, Sk): contract d of both operands (q . k^T, no copy-transpose)
        s = lax.dot_general(qj, kj, (((1,), (1,)), ((), ())),
                            preferred_element_type=jnp.float32)
        if bias_ref is not None:
            s = s + bias_ref[0, 0 if bias_h_is_one else j]
        # numerically-stable softmax; unnormalized through the PV matmul
        m = jnp.max(s, axis=-1, keepdims=True)
        e = jnp.exp(s - m)
        l = jnp.sum(e, axis=-1, keepdims=True)
        # TODO(synk): att_dropout is identity in eval mode; training-mode dropout
        # (pltpu.prng_seed/prng_random_bits masking of `e`) is not implemented.
        ctx = jnp.dot(e.astype(in_dtype), vj, preferred_element_type=jnp.float32)
        pieces.append(ctx * pl.reciprocal(l, approx=True))          # (tq, d)

    blk_ctx = pieces[0] if hb == 1 else jnp.concatenate(pieces, axis=-1)

    if hb == head_size:
        ctx_ref[...] = blk_ctx      # single head block covers all columns
    else:
        start = pl.multiple_of(hblk * (hb * d), hb * d)
        ctx_ref[:, pl.ds(start, hb * d)] = blk_ctx

    @pl.when(hblk == n_hblk - 1)
    def _():
        # Single fused output projection per query tile; bias added exactly once.
        out = jnp.dot(ctx_ref[...].astype(in_dtype), wo_ref[...],
                      preferred_element_type=jnp.float32) + bo_ref[...]
        o_ref[0] = out.astype(o_ref.dtype)


def multi_head_attention(q, k, v, wq, bq, wk, bk, wv, bv, wo, bo, *,
                         head_size, attn_bias=None,
                         heads_per_block=None, q_tile=None):
    """q, k, v: (B, S, hidden).  Weights stored (in_features, out_features)
    (output features head-major, d-minor, i.e. the nn.Linear layout the module
    later .view()s into heads).  Returns (B, Sq, hidden)."""
    B, Sq, H = q.shape
    Sk = k.shape[1]
    assert H % head_size == 0, "hidden_size must be divisible by head_size"
    d = H // head_size
    scale = d ** (-0.5)

    hb = heads_per_block or _pick_heads_per_block(head_size, d)
    assert head_size % hb == 0
    assert hb == head_size or (hb * d) % 128 == 0, "head-block width must be lane-aligned"
    n_hblk = head_size // hb
    tq = q_tile or _pick_q_tile(Sq)
    assert Sq % tq == 0 and (tq == Sq or tq % 8 == 0)
    n_qt = Sq // tq

    # Cheap reshapes only (no per-call weight transposes).
    bq2, bk2, bv2, bo2 = (x.reshape(1, H) for x in (bq, bk, bv, bo))

    in_specs = [
        pl.BlockSpec((1, tq, H), lambda b, qi, h: (b, qi, 0)),    # q tile
        pl.BlockSpec((1, Sk, H), lambda b, qi, h: (b, 0, 0)),     # k (full keys)
        pl.BlockSpec((1, Sk, H), lambda b, qi, h: (b, 0, 0)),     # v
    ]
    args = [q, k, v]

    has_bias = attn_bias is not None
    bias_h_is_one = False
    if has_bias:
        ab = jnp.asarray(attn_bias)
        assert ab.ndim == 4, "attn_bias must be rank-4, broadcastable to (B, heads, Sq, Sk)"
        Bb, Hb_, Sqb, Skb = ab.shape
        assert Bb in (1, B) and Hb_ in (1, head_size) and Sqb in (1, Sq) and Skb in (1, Sk)
        bias_h_is_one = (Hb_ == 1)
        blk = (1, hb if Hb_ == head_size else 1, tq if Sqb == Sq else 1, Skb)
        b_full, h_full, q_full = (Bb == B), (Hb_ == head_size), (Sqb == Sq)

        def bias_index_map(b, qi, h, _bf=b_full, _hf=h_full, _qf=q_full):
            # clamp broadcast (size-1) dims to block 0 -- never materialized dense
            return (b if _bf else 0, h if _hf else 0, qi if _qf else 0, 0)

        in_specs.append(pl.BlockSpec(blk, bias_index_map))
        args.append(ab)

    in_specs += [
        pl.BlockSpec((H, hb * d), lambda b, qi, h: (0, h)),       # Wq head-block cols
        pl.BlockSpec((1, hb * d), lambda b, qi, h: (0, h)),       # bq
        pl.BlockSpec((H, hb * d), lambda b, qi, h: (0, h)),       # Wk
        pl.BlockSpec((1, hb * d), lambda b, qi, h: (0, h)),       # bk
        pl.BlockSpec((H, hb * d), lambda b, qi, h: (0, h)),       # Wv
        pl.BlockSpec((1, hb * d), lambda b, qi, h: (0, h)),       # bv
        pl.BlockSpec((H, H), lambda b, qi, h: (0, 0)),            # Wo (full, resident)
        pl.BlockSpec((1, H), lambda b, qi, h: (0, 0)),            # bo
    ]
    args += [wq, bq2, wk, bk2, wv, bv2, wo, bo2]

    kernel = functools.partial(_mha_kernel, scale=scale, d=d, hb=hb,
                               head_size=head_size, has_bias=has_bias,
                               bias_h_is_one=bias_h_is_one)

    out = pl.pallas_call(
        kernel,
        out_shape=jax.ShapeDtypeStruct((B, Sq, H), q.dtype),
        grid_spec=pltpu.PrefetchScalarGridSpec(
            num_scalar_prefetch=0,
            grid=(B, n_qt, n_hblk),
            in_specs=in_specs,
            out_specs=pl.BlockSpec((1, tq, H), lambda b, qi, h: (b, qi, 0)),
            scratch_shapes=[pltpu.VMEM((tq, H), jnp.float32)],    # packed per-head ctx
        ),
        compiler_params=pltpu.CompilerParams(
            dimension_semantics=("parallel", "parallel", "arbitrary")),
    )(*args)
    return out


if __name__ == "__main__":
    # Small shapes consistent with the module: hidden_size=32, head_size=4 -> att_size=8
    batch, seq, hidden, head_size = 2, 8, 32, 4
    att = hidden // head_size
    dtype = jnp.float32

    key = jax.random.PRNGKey(0)
    (kq, kk, kv, kb, kp,
     k1, k2, k3, k4, k5, k6, k7, k8) = jax.random.split(key, 13)

    q = jax.random.normal(kq, (batch, seq, hidden), dtype)
    k = jax.random.normal(kk, (batch, seq, hidden), dtype)
    v = jax.random.normal(kv, (batch, seq, hidden), dtype)
    attn_bias = 0.1 * jax.random.normal(kb, (batch, head_size, seq, seq), dtype)
    pad_bias = 0.1 * jax.random.normal(kp, (1, 1, 1, seq), dtype)   # broadcastable mask

    # Deterministic parameter init (nn.Linear-style bounds), stored (in, out).
    bound = 1.0 / math.sqrt(hidden)
    wq = jax.random.uniform(k1, (hidden, hidden), dtype, -bound, bound)
    bq = jax.random.uniform(k2, (hidden,), dtype, -bound, bound)
    wk = jax.random.uniform(k3, (hidden, hidden), dtype, -bound, bound)
    bk = jax.random.uniform(k4, (hidden,), dtype, -bound, bound)
    wv = jax.random.uniform(k5, (hidden, hidden), dtype, -bound, bound)
    bv = jax.random.uniform(k6, (hidden,), dtype, -bound, bound)
    wo = jax.random.uniform(k7, (hidden, hidden), dtype, -bound, bound)
    bo = jax.random.uniform(k8, (hidden,), dtype, -bound, bound)

    def reference(bias):
        # Pure-JAX reference matching the PyTorch forward (eval mode: dropout = identity).
        scale = att ** (-0.5)
        qp = (q @ wq + bq).reshape(batch, seq, head_size, att).transpose(0, 2, 1, 3)
        kp_ = (k @ wk + bk).reshape(batch, seq, head_size, att).transpose(0, 2, 1, 3)
        vp = (v @ wv + bv).reshape(batch, seq, head_size, att).transpose(0, 2, 1, 3)
        s = jnp.einsum('bhqd,bhkd->bhqk', qp * scale, kp_)
        if bias is not None:
            s = s + bias
        p = jax.nn.softmax(s, axis=-1)
        ctx = jnp.einsum('bhqk,bhkd->bhqd', p, vp)
        ctx = ctx.transpose(0, 2, 1, 3).reshape(batch, seq, hidden)
        return ctx @ wo + bo

    def check(out, ref, name):
        assert out.shape == q.shape
        err = float(jnp.max(jnp.abs(out - ref)))
        # approx reciprocal in the softmax normalization -> slightly loose tolerance
        assert jnp.allclose(out, ref, atol=2e-3, rtol=2e-3), \
            f"{name}: mismatch vs reference, max abs err = {err}"

    run = functools.partial(multi_head_attention, q, k, v,
                            wq, bq, wk, bk, wv, bv, wo, bo, head_size=head_size)

    # 1) dense per-(batch, head) bias
    out = jax.block_until_ready(run(attn_bias=attn_bias))
    check(out, reference(attn_bias), "dense bias")

    # 2) broadcastable (padding-mask style) bias -- clamped via index_map, not broadcast
    out = jax.block_until_ready(run(attn_bias=pad_bias))
    check(out, reference(pad_bias), "broadcast bias")

    # 3) no bias -- specialized kernel with the bias input dropped entirely
    out = jax.block_until_ready(run(attn_bias=None))
    check(out, reference(None), "no bias")

    print("KERNEL_OK")
</pallas_src>

<mosaic_0001>
module attributes {stable_mosaic.version = 11 : i64} {
  func.func @_mha_kernel(%arg0: i32, %arg1: i32, %arg2: i32, %arg3: memref<1x8x32xf32, #tpu.memory_space<vmem>>, %arg4: memref<1x8x32xf32, #tpu.memory_space<vmem>>, %arg5: memref<1x8x32xf32, #tpu.memory_space<vmem>>, %arg6: memref<1x4x8x8xf32, #tpu.memory_space<vmem>>, %arg7: memref<32x32xf32, #tpu.memory_space<vmem>>, %arg8: memref<1x32xf32, #tpu.memory_space<vmem>>, %arg9: memref<32x32xf32, #tpu.memory_space<vmem>>, %arg10: memref<1x32xf32, #tpu.memory_space<vmem>>, %arg11: memref<32x32xf32, #tpu.memory_space<vmem>>, %arg12: memref<1x32xf32, #tpu.memory_space<vmem>>, %arg13: memref<32x32xf32, #tpu.memory_space<vmem>>, %arg14: memref<1x32xf32, #tpu.memory_space<vmem>>, %arg15: memref<1x8x32xf32, #tpu.memory_space<vmem>>, %arg16: memref<8x32xf32, #tpu.memory_space<vmem>>) attributes {dimension_semantics = [#tpu.dimension_semantics<parallel>, #tpu.dimension_semantics<parallel>, #tpu.dimension_semantics<arbitrary>], iteration_bounds = array<i64: 2, 1, 1>, scalar_prefetch = 0 : i64, scratch_operands = 1 : i64, tpu.core_type = #tpu.core_type<tc>, window_params = [{transform_indices = @transform_0, window_bounds = array<i64: 1, 8, 32>}, {transform_indices = @transform_1, window_bounds = array<i64: 1, 8, 32>}, {transform_indices = @transform_2, window_bounds = array<i64: 1, 8, 32>}, {transform_indices = @transform_3, window_bounds = array<i64: 1, 4, 8, 8>}, {transform_indices = @transform_4, window_bounds = array<i64: 32, 32>}, {transform_indices = @transform_5, window_bounds = array<i64: 1, 32>}, {transform_indices = @transform_6, window_bounds = array<i64: 32, 32>}, {transform_indices = @transform_7, window_bounds = array<i64: 1, 32>}, {transform_indices = @transform_8, window_bounds = array<i64: 32, 32>}, {transform_indices = @transform_9, window_bounds = array<i64: 1, 32>}, {pipeline_mode = #tpu.pipeline_mode<synchronous>, transform_indices = @transform_10, window_bounds = array<i64: 32, 32>}, {pipeline_mode = #tpu.pipeline_mode<synchronous>, transform_indices = @transform_11, window_bounds = array<i64: 1, 32>}, {transform_indices = @transform_12, window_bounds = array<i64: 1, 8, 32>}]} {
    %c0 = arith.constant 0 : index
    %c0_0 = arith.constant 0 : index
    %c0_1 = arith.constant 0 : index
    %0 = vector.load %arg3[%c0, %c0_0, %c0_1] : memref<1x8x32xf32, #tpu.memory_space<vmem>>, vector<1x8x32xf32>
    %1 = vector.shape_cast %0 : vector<1x8x32xf32> to vector<8x32xf32>
    %c0_2 = arith.constant 0 : index
    %c0_3 = arith.constant 0 : index
    %c0_4 = arith.constant 0 : index
    %2 = vector.load %arg4[%c0_2, %c0_3, %c0_4] : memref<1x8x32xf32, #tpu.memory_space<vmem>>, vector<1x8x32xf32>
    %3 = vector.shape_cast %2 : vector<1x8x32xf32> to vector<8x32xf32>
    %c0_5 = arith.constant 0 : index
    %c0_6 = arith.constant 0 : index
    %c0_7 = arith.constant 0 : index
    %4 = vector.load %arg5[%c0_5, %c0_6, %c0_7] : memref<1x8x32xf32, #tpu.memory_space<vmem>>, vector<1x8x32xf32>
    %5 = vector.shape_cast %4 : vector<1x8x32xf32> to vector<8x32xf32>
    %c0_8 = arith.constant 0 : index
    %c0_9 = arith.constant 0 : index
    %6 = vector.load %arg7[%c0_8, %c0_9] : memref<32x32xf32, #tpu.memory_space<vmem>>, vector<32x32xf32>
    %cst = arith.constant dense<0.000000e+00> : vector<8x32xf32>
    %7 = tpu.matmul %1, %6, %cst {dimension_numbers = #tpu.dot_dimension_numbers<[1], [0], [0], [1], [0, 0, 1, 1], [], []>} : vector<8x32xf32>, vector<32x32xf32>, vector<8x32xf32> -> vector<8x32xf32>
    %c0_10 = arith.constant 0 : index
    %c0_11 = arith.constant 0 : index
    %8 = vector.load %arg8[%c0_10, %c0_11] : memref<1x32xf32, #tpu.memory_space<vmem>>, vector<1x32xf32>
    %9 = vector.broadcast %8 : vector<1x32xf32> to vector<8x32xf32>
    %10 = arith.addf %7, %9 : vector<8x32xf32>
    %c0_12 = arith.constant 0 : index
    %c0_13 = arith.constant 0 : index
    %11 = vector.load %arg9[%c0_12, %c0_13] : memref<32x32xf32, #tpu.memory_space<vmem>>, vector<32x32xf32>
    %cst_14 = arith.constant dense<0.000000e+00> : vector<8x32xf32>
    %12 = tpu.matmul %3, %11, %cst_14 {dimension_numbers = #tpu.dot_dimension_numbers<[1], [0], [0], [1], [0, 0, 1, 1], [], []>} : vector<8x32xf32>, vector<32x32xf32>, vector<8x32xf32> -> vector<8x32xf32>
    %c0_15 = arith.constant 0 : index
    %c0_16 = arith.constant 0 : index
    %13 = vector.load %arg10[%c0_15, %c0_16] : memref<1x32xf32, #tpu.memory_space<vmem>>, vector<1x32xf32>
    %14 = vector.broadcast %13 : vector<1x32xf32> to vector<8x32xf32>
    %15 = arith.addf %12, %14 : vector<8x32xf32>
    %c0_17 = arith.constant 0 : index
    %c0_18 = arith.constant 0 : index
    %16 = vector.load %arg11[%c0_17, %c0_18] : memref<32x32xf32, #tpu.memory_space<vmem>>, vector<32x32xf32>
    %cst_19 = arith.constant dense<0.000000e+00> : vector<8x32xf32>
    %17 = tpu.matmul %5, %16, %cst_19 {dimension_numbers = #tpu.dot_dimension_numbers<[1], [0], [0], [1], [0, 0, 1, 1], [], []>} : vector<8x32xf32>, vector<32x32xf32>, vector<8x32xf32> -> vector<8x32xf32>
    %c0_20 = arith.constant 0 : index
    %c0_21 = arith.constant 0 : index
    %18 = vector.load %arg12[%c0_20, %c0_21] : memref<1x32xf32, #tpu.memory_space<vmem>>, vector<1x32xf32>
    %19 = vector.broadcast %18 : vector<1x32xf32> to vector<8x32xf32>
    %20 = arith.addf %17, %19 : vector<8x32xf32>
    %cst_22 = arith.constant 0.353553385 : f32
    %21 = vector.broadcast %cst_22 : f32 to vector<8x32xf32>
    %22 = arith.mulf %10, %21 : vector<8x32xf32>
    %23 = vector.extract_strided_slice %22 {offsets = [0, 0], sizes = [8, 8], strides = [1, 1]} : vector<8x32xf32> to vector<8x8xf32>
    %24 = vector.extract_strided_slice %15 {offsets = [0, 0], sizes = [8, 8], strides = [1, 1]} : vector<8x32xf32> to vector<8x8xf32>
    %25 = vector.extract_strided_slice %20 {offsets = [0, 0], sizes = [8, 8], strides = [1, 1]} : vector<8x32xf32> to vector<8x8xf32>
    %cst_23 = arith.constant dense<0.000000e+00> : vector<8x8xf32>
    %26 = tpu.matmul %23, %24, %cst_23 {dimension_numbers = #tpu.dot_dimension_numbers<[1], [1], [0], [0], [0, 0, 1, 0], [], []>} : vector<8x8xf32>, vector<8x8xf32>, vector<8x8xf32> -> vector<8x8xf32>
    %c0_24 = arith.constant 0 : index
    %c0_25 = arith.constant 0 : index
    %c0_26 = arith.constant 0 : index
    %c0_27 = arith.constant 0 : index
    %27 = vector.load %arg6[%c0_24, %c0_25, %c0_26, %c0_27] : memref<1x4x8x8xf32, #tpu.memory_space<vmem>>, vector<1x1x8x8xf32>
    %28 = vector.shape_cast %27 : vector<1x1x8x8xf32> to vector<8x8xf32>
    %29 = arith.addf %26, %28 : vector<8x8xf32>
    %cst_28 = arith.constant dense<0xFF800000> : vector<8xf32>
    %30 = vector.multi_reduction <maximumf>, %29, %cst_28 [1] : vector<8x8xf32> to vector<8xf32>
    %31 = vector.shape_cast %30 : vector<8xf32> to vector<8x1xf32>
    %32 = vector.broadcast %31 : vector<8x1xf32> to vector<8x8xf32>
    %33 = arith.subf %29, %32 : vector<8x8xf32>
    %34 = math.exp %33 : vector<8x8xf32>
    %cst_29 = arith.constant dense<0.000000e+00> : vector<8xf32>
    %35 = vector.multi_reduction <add>, %34, %cst_29 [1] : vector<8x8xf32> to vector<8xf32>
    %36 = vector.shape_cast %35 : vector<8xf32> to vector<8x1xf32>
    %cst_30 = arith.constant dense<0.000000e+00> : vector<8x8xf32>
    %37 = tpu.matmul %34, %25, %cst_30 {dimension_numbers = #tpu.dot_dimension_numbers<[1], [0], [0], [1], [0, 0, 1, 1], [], []>} : vector<8x8xf32>, vector<8x8xf32>, vector<8x8xf32> -> vector<8x8xf32>
    %38 = tpu.reciprocal %36 {approx = true} : vector<8x1xf32> -> vector<8x1xf32>
    %39 = vector.broadcast %38 : vector<8x1xf32> to vector<8x8xf32>
    %40 = arith.mulf %37, %39 : vector<8x8xf32>
    %41 = vector.extract_strided_slice %22 {offsets = [0, 8], sizes = [8, 8], strides = [1, 1]} : vector<8x32xf32> to vector<8x8xf32>
    %42 = vector.extract_strided_slice %15 {offsets = [0, 8], sizes = [8, 8], strides = [1, 1]} : vector<8x32xf32> to vector<8x8xf32>
    %43 = vector.extract_strided_slice %20 {offsets = [0, 8], sizes = [8, 8], strides = [1, 1]} : vector<8x32xf32> to vector<8x8xf32>
    %cst_31 = arith.constant dense<0.000000e+00> : vector<8x8xf32>
    %44 = tpu.matmul %41, %42, %cst_31 {dimension_numbers = #tpu.dot_dimension_numbers<[1], [1], [0], [0], [0, 0, 1, 0], [], []>} : vector<8x8xf32>, vector<8x8xf32>, vector<8x8xf32> -> vector<8x8xf32>
    %c0_32 = arith.constant 0 : index
    %c1 = arith.constant 1 : index
    %c0_33 = arith.constant 0 : index
    %c0_34 = arith.constant 0 : index
    %45 = vector.load %arg6[%c0_32, %c1, %c0_33, %c0_34] : memref<1x4x8x8xf32, #tpu.memory_space<vmem>>, vector<1x1x8x8xf32>
    %46 = vector.shape_cast %45 : vector<1x1x8x8xf32> to vector<8x8xf32>
    %47 = arith.addf %44, %46 : vector<8x8xf32>
    %cst_35 = arith.constant dense<0xFF800000> : vector<8xf32>
    %48 = vector.multi_reduction <maximumf>, %47, %cst_35 [1] : vector<8x8xf32> to vector<8xf32>
    %49 = vector.shape_cast %48 : vector<8xf32> to vector<8x1xf32>
    %50 = vector.broadcast %49 : vector<8x1xf32> to vector<8x8xf32>
    %51 = arith.subf %47, %50 : vector<8x8xf32>
    %52 = math.exp %51 : vector<8x8xf32>
    %cst_36 = arith.constant dense<0.000000e+00> : vector<8xf32>
    %53 = vector.multi_reduction <add>, %52, %cst_36 [1] : vector<8x8xf32> to vector<8xf32>
    %54 = vector.shape_cast %53 : vector<8xf32> to vector<8x1xf32>
    %cst_37 = arith.constant dense<0.000000e+00> : vector<8x8xf32>
    %55 = tpu.matmul %52, %43, %cst_37 {dimension_numbers = #tpu.dot_dimension_numbers<[1], [0], [0], [1], [0, 0, 1, 1], [], []>} : vector<8x8xf32>, vector<8x8xf32>, vector<8x8xf32> -> vector<8x8xf32>
    %56 = tpu.reciprocal %54 {approx = true} : vector<8x1xf32> -> vector<8x1xf32>
    %57 = vector.broadcast %56 : vector<8x1xf32> to vector<8x8xf32>
    %58 = arith.mulf %55, %57 : vector<8x8xf32>
    %59 = vector.extract_strided_slice %22 {offsets = [0, 16], sizes = [8, 8], strides = [1, 1]} : vector<8x32xf32> to vector<8x8xf32>
    %60 = vector.extract_strided_slice %15 {offsets = [0, 16], sizes = [8, 8], strides = [1, 1]} : vector<8x32xf32> to vector<8x8xf32>
    %61 = vector.extract_strided_slice %20 {offsets = [0, 16], sizes = [8, 8], strides = [1, 1]} : vector<8x32xf32> to vector<8x8xf32>
    %cst_38 = arith.constant dense<0.000000e+00> : vector<8x8xf32>
    %62 = tpu.matmul %59, %60, %cst_38 {dimension_numbers = #tpu.dot_dimension_numbers<[1], [1], [0], [0], [0, 0, 1, 0], [], []>} : vector<8x8xf32>, vector<8x8xf32>, vector<8x8xf32> -> vector<8x8xf32>
    %c0_39 = arith.constant 0 : index
    %c2 = arith.constant 2 : index
    %c0_40 = arith.constant 0 : index
    %c0_41 = arith.constant 0 : index
    %63 = vector.load %arg6[%c0_39, %c2, %c0_40, %c0_41] : memref<1x4x8x8xf32, #tpu.memory_space<vmem>>, vector<1x1x8x8xf32>
    %64 = vector.shape_cast %63 : vector<1x1x8x8xf32> to vector<8x8xf32>
    %65 = arith.addf %62, %64 : vector<8x8xf32>
    %cst_42 = arith.constant dense<0xFF800000> : vector<8xf32>
    %66 = vector.multi_reduction <maximumf>, %65, %cst_42 [1] : vector<8x8xf32> to vector<8xf32>
    %67 = vector.shape_cast %66 : vector<8xf32> to vector<8x1xf32>
    %68 = vector.broadcast %67 : vector<8x1xf32> to vector<8x8xf32>
    %69 = arith.subf %65, %68 : vector<8x8xf32>
    %70 = math.exp %69 : vector<8x8xf32>
    %cst_43 = arith.constant dense<0.000000e+00> : vector<8xf32>
    %71 = vector.multi_reduction <add>, %70, %cst_43 [1] : vector<8x8xf32> to vector<8xf32>
    %72 = vector.shape_cast %71 : vector<8xf32> to vector<8x1xf32>
    %cst_44 = arith.constant dense<0.000000e+00> : vector<8x8xf32>
    %73 = tpu.matmul %70, %61, %cst_44 {dimension_numbers = #tpu.dot_dimension_numbers<[1], [0], [0], [1], [0, 0, 1, 1], [], []>} : vector<8x8xf32>, vector<8x8xf32>, vector<8x8xf32> -> vector<8x8xf32>
    %74 = tpu.reciprocal %72 {approx = true} : vector<8x1xf32> -> vector<8x1xf32>
    %75 = vector.broadcast %74 : vector<8x1xf32> to vector<8x8xf32>
    %76 = arith.mulf %73, %75 : vector<8x8xf32>
    %77 = vector.extract_strided_slice %22 {offsets = [0, 24], sizes = [8, 8], strides = [1, 1]} : vector<8x32xf32> to vector<8x8xf32>
    %78 = vector.extract_strided_slice %15 {offsets = [0, 24], sizes = [8, 8], strides = [1, 1]} : vector<8x32xf32> to vector<8x8xf32>
    %79 = vector.extract_strided_slice %20 {offsets = [0, 24], sizes = [8, 8], strides = [1, 1]} : vector<8x32xf32> to vector<8x8xf32>
    %cst_45 = arith.constant dense<0.000000e+00> : vector<8x8xf32>
    %80 = tpu.matmul %77, %78, %cst_45 {dimension_numbers = #tpu.dot_dimension_numbers<[1], [1], [0], [0], [0, 0, 1, 0], [], []>} : vector<8x8xf32>, vector<8x8xf32>, vector<8x8xf32> -> vector<8x8xf32>
    %c0_46 = arith.constant 0 : index
    %c3 = arith.constant 3 : index
    %c0_47 = arith.constant 0 : index
    %c0_48 = arith.constant 0 : index
    %81 = vector.load %arg6[%c0_46, %c3, %c0_47, %c0_48] : memref<1x4x8x8xf32, #tpu.memory_space<vmem>>, vector<1x1x8x8xf32>
    %82 = vector.shape_cast %81 : vector<1x1x8x8xf32> to vector<8x8xf32>
    %83 = arith.addf %80, %82 : vector<8x8xf32>
    %cst_49 = arith.constant dense<0xFF800000> : vector<8xf32>
    %84 = vector.multi_reduction <maximumf>, %83, %cst_49 [1] : vector<8x8xf32> to vector<8xf32>
    %85 = vector.shape_cast %84 : vector<8xf32> to vector<8x1xf32>
    %86 = vector.broadcast %85 : vector<8x1xf32> to vector<8x8xf32>
    %87 = arith.subf %83, %86 : vector<8x8xf32>
    %88 = math.exp %87 : vector<8x8xf32>
    %cst_50 = arith.constant dense<0.000000e+00> : vector<8xf32>
    %89 = vector.multi_reduction <add>, %88, %cst_50 [1] : vector<8x8xf32> to vector<8xf32>
    %90 = vector.shape_cast %89 : vector<8xf32> to vector<8x1xf32>
    %cst_51 = arith.constant dense<0.000000e+00> : vector<8x8xf32>
    %91 = tpu.matmul %88, %79, %cst_51 {dimension_numbers = #tpu.dot_dimension_numbers<[1], [0], [0], [1], [0, 0, 1, 1], [], []>} : vector<8x8xf32>, vector<8x8xf32>, vector<8x8xf32> -> vector<8x8xf32>
    %92 = tpu.reciprocal %90 {approx = true} : vector<8x1xf32> -> vector<8x1xf32>
    %93 = vector.broadcast %92 : vector<8x1xf32> to vector<8x8xf32>
    %94 = arith.mulf %91, %93 : vector<8x8xf32>
    %95 = tpu.concatenate %40, %58, %76, %94 in 1 : vector<8x8xf32>, vector<8x8xf32>, vector<8x8xf32>, vector<8x8xf32> -> vector<8x32xf32>
    %c0_52 = arith.constant 0 : index
    %c0_53 = arith.constant 0 : index
    %96 = vector.load %arg16[%c0_52, %c0_53] : memref<8x32xf32, #tpu.memory_space<vmem>>, vector<8x32xf32>
    tpu.vector_store %arg16[%c0_52, %c0_53], %95 {strides = array<i32>} : memref<8x32xf32, #tpu.memory_space<vmem>>, vector<8x32xf32>,
    %c0_i32 = arith.constant 0 : i32
    %97 = arith.cmpi eq, %arg2, %c0_i32 : i32
    %98 = arith.extui %97 : i1 to i32
    %c0_i32_54 = arith.constant 0 : i32
    %99 = arith.cmpi ne, %98, %c0_i32_54 : i32
    scf.if %99 {
      %c0_55 = arith.constant 0 : index
      %c0_56 = arith.constant 0 : index
      %100 = vector.load %arg16[%c0_55, %c0_56] : memref<8x32xf32, #tpu.memory_space<vmem>>, vector<8x32xf32>
      %c0_57 = arith.constant 0 : index
      %c0_58 = arith.constant 0 : index
      %101 = vector.load %arg13[%c0_57, %c0_58] : memref<32x32xf32, #tpu.memory_space<vmem>>, vector<32x32xf32>
      %cst_59 = arith.constant dense<0.000000e+00> : vector<8x32xf32>
      %102 = tpu.matmul %100, %101, %cst_59 {dimension_numbers = #tpu.dot_dimension_numbers<[1], [0], [0], [1], [0, 0, 1, 1], [], []>} : vector<8x32xf32>, vector<32x32xf32>, vector<8x32xf32> -> vector<8x32xf32>
      %c0_60 = arith.constant 0 : index
      %c0_61 = arith.constant 0 : index
      %103 = vector.load %arg14[%c0_60, %c0_61] : memref<1x32xf32, #tpu.memory_space<vmem>>, vector<1x32xf32>
      %104 = vector.broadcast %103 : vector<1x32xf32> to vector<8x32xf32>
      %105 = arith.addf %102, %104 : vector<8x32xf32>
      %c0_62 = arith.constant 0 : index
      %c0_63 = arith.constant 0 : index
      %c0_64 = arith.constant 0 : index
      %106 = vector.load %arg15[%c0_62, %c0_63, %c0_64] : memref<1x8x32xf32, #tpu.memory_space<vmem>>, vector<1x8x32xf32>
      %107 = vector.shape_cast %106 : vector<1x8x32xf32> to vector<8x32xf32>
      %108 = vector.shape_cast %105 : vector<8x32xf32> to vector<1x8x32xf32>
      tpu.vector_store %arg15[%c0_62, %c0_63, %c0_64], %108 {strides = array<i32>} : memref<1x8x32xf32, #tpu.memory_space<vmem>>, vector<1x8x32xf32>,
    } else {
    }
    return
  }
  func.func @transform_0(%arg0: i32, %arg1: i32, %arg2: i32) -> (i32, i32, i32) {
    %c0_i32 = arith.constant 0 : i32
    %c0_i32_0 = arith.constant 0 : i32
    return %arg0, %arg1, %c0_i32 : i32, i32, i32
  }
  func.func @transform_1(%arg0: i32, %arg1: i32, %arg2: i32) -> (i32, i32, i32) {
    %c0_i32 = arith.constant 0 : i32
    %c0_i32_0 = arith.constant 0 : i32
    %c0_i32_1 = arith.constant 0 : i32
    return %arg0, %c0_i32, %c0_i32_0 : i32, i32, i32
  }
  func.func @transform_2(%arg0: i32, %arg1: i32, %arg2: i32) -> (i32, i32, i32) {
    %c0_i32 = arith.constant 0 : i32
    %c0_i32_0 = arith.constant 0 : i32
    %c0_i32_1 = arith.constant 0 : i32
    return %arg0, %c0_i32, %c0_i32_0 : i32, i32, i32
  }
  func.func @transform_3(%arg0: i32, %arg1: i32, %arg2: i32) -> (i32, i32, i32, i32) {
    %c0_i32 = arith.constant 0 : i32
    %c0_i32_0 = arith.constant 0 : i32
    return %arg0, %arg2, %arg1, %c0_i32 : i32, i32, i32, i32
  }
  func.func @transform_4(%arg0: i32, %arg1: i32, %arg2: i32) -> (i32, i32) {
    %c0_i32 = arith.constant 0 : i32
    %c0_i32_0 = arith.constant 0 : i32
    return %c0_i32, %arg2 : i32, i32
  }
  func.func @transform_5(%arg0: i32, %arg1: i32, %arg2: i32) -> (i32, i32) {
    %c0_i32 = arith.constant 0 : i32
    %c0_i32_0 = arith.constant 0 : i32
    return %c0_i32, %arg2 : i32, i32
  }
  func.func @transform_6(%arg0: i32, %arg1: i32, %arg2: i32) -> (i32, i32) {
    %c0_i32 = arith.constant 0 : i32
    %c0_i32_0 = arith.constant 0 : i32
    return %c0_i32, %arg2 : i32, i32
  }
  func.func @transform_7(%arg0: i32, %arg1: i32, %arg2: i32) -> (i32, i32) {
    %c0_i32 = arith.constant 0 : i32
    %c0_i32_0 = arith.constant 0 : i32
    return %c0_i32, %arg2 : i32, i32
  }
  func.func @transform_8(%arg0: i32, %arg1: i32, %arg2: i32) -> (i32, i32) {
    %c0_i32 = arith.constant 0 : i32
    %c0_i32_0 = arith.constant 0 : i32
    return %c0_i32, %arg2 : i32, i32
  }
  func.func @transform_9(%arg0: i32, %arg1: i32, %arg2: i32) -> (i32, i32) {
    %c0_i32 = arith.constant 0 : i32
    %c0_i32_0 = arith.constant 0 : i32
    return %c0_i32, %arg2 : i32, i32
  }
  func.func @transform_10(%arg0: i32, %arg1: i32, %arg2: i32) -> (i32, i32) {
    %c0_i32 = arith.constant 0 : i32
    %c0_i32_0 = arith.constant 0 : i32
    %c0_i32_1 = arith.constant 0 : i32
    return %c0_i32, %c0_i32_0 : i32, i32
  }
  func.func @transform_11(%arg0: i32, %arg1: i32, %arg2: i32) -> (i32, i32) {
    %c0_i32 = arith.constant 0 : i32
    %c0_i32_0 = arith.constant 0 : i32
    %c0_i32_1 = arith.constant 0 : i32
    return %c0_i32, %c0_i32_0 : i32, i32
  }
  func.func @transform_12(%arg0: i32, %arg1: i32, %arg2: i32) -> (i32, i32, i32) {
    %c0_i32 = arith.constant 0 : i32
    %c0_i32_0 = arith.constant 0 : i32
    return %arg0, %arg1, %c0_i32 : i32, i32, i32
  }
}

</mosaic_0001>

<llo_original>
// kernel: tpu_custom_call.1
$region0: #{tpu_custom_call.1}
  #allocation0 [shape = 'u32[]', space=smem, size = 0x4, offset = 0x4, fixed_abs, tag = 'smem constant byte address 0x4 - core index']
  #allocation1 [shape = 'u32[144,128]{1,0:T(1,128)}', space=vmem, size = 0x12000, scoped, tag = 'internal scratch']
  #allocation2 [shape = 'f32[8,32]{1,0:T(8,128)}', space=vmem, size = 0x1000, scoped, tag = 'scratch operand']
  %s0 = inlined_call_operand.hbm [shape: f32[2,8,32], index: 0, kind: input, shape index: {}]
  %s1 = inlined_call_operand.hbm [shape: f32[2,8,32], index: 1, kind: input, shape index: {}]
  %s2 = inlined_call_operand.hbm [shape: f32[2,8,32], index: 2, kind: input, shape index: {}]
  %s3 = inlined_call_operand.hbm [shape: f32[2,4,8,8], index: 3, kind: input, shape index: {}]
  %s4 = inlined_call_operand.hbm [shape: f32[32,32], index: 4, kind: input, shape index: {}]
  %s5 = inlined_call_operand.vmem [shape: f32[1,32], index: 5, kind: input, shape index: {}]
  %s6 = inlined_call_operand.hbm [shape: f32[32,32], index: 6, kind: input, shape index: {}]
  %s7 = inlined_call_operand.vmem [shape: f32[1,32], index: 7, kind: input, shape index: {}]
  %s8 = inlined_call_operand.hbm [shape: f32[32,32], index: 8, kind: input, shape index: {}]
  %s9 = inlined_call_operand.vmem [shape: f32[1,32], index: 9, kind: input, shape index: {}]
  %s10 = inlined_call_operand.vmem [shape: f32[32,32], index: 10, kind: input, shape index: {}]
  %s11 = inlined_call_operand.vmem [shape: f32[1,32], index: 11, kind: input, shape index: {}]
  %s12 = inlined_call_operand.hbm [shape: f32[2,8,32], index: 12, kind: output, shape index: {}]
  %s13 = sld [smem:[#allocation0]]
  $region113: #{tpu_custom_call.1} parent=0
    _
  %s15 = ssub.s32 1, %s13
  %s16 = scalar_select 0, %s15, %s13
  $region1: #{tpu_custom_call.1} parent=0
    #allocation3 [shape = 'u8[8192]{0}', space=vmem, size = 0x2000, scoped, tag = 'input window, operand 0']
    #allocation4 [shape = 's32[2]{0}', space=sflag, size = 0x8, scoped, tag = 'scoped memory for tpu_custom_call.1']
    #allocation5 [shape = 's32[2]{0}', space=sflag, size = 0x8, scoped, tag = 'scoped memory for tpu_custom_call.1']
    #allocation6 [shape = 'u8[8192]{0}', space=vmem, size = 0x2000, scoped, tag = 'input window, operand 1']
    #allocation7 [shape = 's32[2]{0}', space=sflag, size = 0x8, scoped, tag = 'scoped memory for tpu_custom_call.1']
    #allocation8 [shape = 'u8[8192]{0}', space=vmem, size = 0x2000, scoped, tag = 'input window, operand 2']
    #allocation9 [shape = 'u8[32768]{0}', space=vmem, size = 0x8000, scoped, tag = 'input window, operand 3']
    #allocation10 [shape = 's32[2]{0}', space=sflag, size = 0x8, scoped, tag = 'scoped memory for tpu_custom_call.1']
    #allocation11 [shape = 'u8[16384]{0}', space=vmem, size = 0x4000, scoped, tag = 'input window, operand 4, single buffered']
    #allocation12 [shape = 'u8[16384]{0}', space=vmem, size = 0x4000, scoped, tag = 'input window, operand 6, single buffered']
    #allocation13 [shape = 's32[1]{0}', space=sflag, size = 0x4, scoped, tag = 'scoped memory for tpu_custom_call.1']
    #allocation14 [shape = 'u8[16384]{0}', space=vmem, size = 0x4000, scoped, tag = 'input window, operand 8, single buffered']
    #allocation15 [shape = 'u8[8192]{0}', space=vmem, size = 0x2000, scoped, tag = 'output window, operand 0']
    %17 = vsyncpa [#allocation4], 0
    %s18 = scalar_lea.sflag [#allocation4], 1
    %19 = vsyncpa %s18, 0
    %20 = vsyncpa [#allocation7], 0
    %s21 = scalar_lea.sflag [#allocation7], 1
    %22 = vsyncpa %s21, 0
    %23 = vsyncpa [#allocation10], 0
    %s24 = scalar_lea.sflag [#allocation10], 1
    %25 = vsyncpa %s24, 0
    %26 = vsyncpa [#allocation13], 0
    %27 = vsyncpa [#allocation5], 0
    %s28 = scalar_lea.sflag [#allocation5], 1
    %29 = vsyncpa %s28, 0
    loop: start=0, step=1, limit=4
    $region2: #{tpu_custom_call.1} parent=1 // loop_pre_header
      _
    $region3: #{tpu_custom_call.1} parent=1 // loop_header
      %s31 = sphi 0, %s35
      %p32 = scmp.ge.s32.totalorder %s31, 4
      %s38 = sphi 0, %s57
      %s39 = sphi 0, %s53
      %s40 = sphi 0, %s49
      %s41 = sphi 0, %s38
      %s42 = sphi 0, %s39
      %s43 = sphi 0, %s40
      %s44 = sphi 0, %s41
      %s45 = sphi 0, %s42
      %s46 = sphi 0, %s43
      %s62 = sphi 0, %s64
      %s65 = sphi 0, %s62
      %s66 = sphi 0, %s65
      %s82 = sphi 0, %s66
      %s88 = sphi 0, %s90
      %s91 = sphi 0, %s88
      %s92 = sphi 0, %s91
      %s108 = sphi 0, %s92
      %s114 = sphi 0, %s116
      %s117 = sphi 0, %s114
      %s118 = sphi 0, %s117
      %s134 = sphi 0, %s118
      %s144 = sphi 0, %s146
      %s147 = sphi 0, %s144
      %s148 = sphi 0, %s147
      %s164 = sphi 0, %s148
      %s170 = sphi 0, %s172
      %s173 = sphi 0, %s170
      %s174 = sphi 0, %s173
      %s190 = sphi 0, %s174
      %s196 = sphi 0, %s198
      %s199 = sphi 0, %s196
      %s200 = sphi 0, %s199
      %s216 = sphi 0, %s200
      %s222 = sphi 0, %s224
      %s225 = sphi 0, %s222
      %s226 = sphi 0, %s225
      %s242 = sphi 0, %s226
      %s248 = sphi 0, %s250
      %s251 = sphi 0, %s248
      %s252 = sphi 0, %s251
      %s268 = sphi 0, %s252
      %s274 = sphi 0, %s276
      %s277 = sphi 0, %s274
      %s278 = sphi 0, %s277
      %s294 = sphi 0, %s278
      %s300 = sphi 0, %s302
      %s303 = sphi 0, %s300
      %s304 = sphi 0, %s303
      %s320 = sphi 0, %s304
      %s324 = sphi 0, %s324
      %s326 = sphi 0, %s324
      %s327 = sphi 0, %s326
      %s341 = sphi 0, %s327
      %s345 = sphi 0, %s345
      %s347 = sphi 0, %s345
      %s348 = sphi 0, %s347
      %s362 = sphi 0, %s348
      %s370 = sphi 0, %s372
      %s373 = sphi 0, %s370
      %s374 = sphi 0, %s373
      %s390 = sphi 0, %s374
    $region4: #{tpu_custom_call.1} parent=1 // loop_header_branch
      %34 = sbr.rel (%p32) target = $region8
    $region5: #{tpu_custom_call.1} parent=1 // loop_body
      %s36 = ssub.s32 %s31, 1
      %s37 = ssub.s32 %s31, 2
      %s47 = sadd.s32 1, %s40
      %p48 = scmp.ge.s32.totalorder %s47, 1
      %s49 = scalar_select %p48, 0, %s47
      %s50 = sadd.s32 1, %s39
      %s51 = scalar_select %p48, %s50, %s39
      %p52 = scmp.ge.s32.totalorder %s51, 1
      %s53 = scalar_select %p52, 0, %s51
      %s54 = sadd.s32 1, %s38
      %s55 = scalar_select %p52, %s54, %s38
      %p56 = scmp.ge.s32.totalorder %s55, 2
      %s57 = scalar_select %p56, 0, %s55
      %s58 = ssub.s32 %s38, %s57
      %s59 = ssub.s32 %s39, %s53
      %s60 = sor.u32 %s58, %s59
      %p61 = scmp.eq.s32.totalorder %s60, 0
      %s63 = sadd.s32 %s62, 1
      %s64 = scalar_select %p61, %s62, %s63
      %p67 = pneg %p61
      %p68 = scmp.eq.s32.totalorder %s31, 1
      %p69 = por %p67, %p68
      %p70 = scmp.ne.s32.totalorder %s62, %s65
      %p71 = scmp.eq.s32.totalorder %s31, 0
      %p72 = por %p70, %p71
      %p73 = scmp.ne.s32.totalorder %s62, %s65
      %p74 = scmp.eq.s32.totalorder %s36, 1
      %p75 = por %p73, %p74
      %p76 = scmp.ne.s32.totalorder %s65, %s66
      %p77 = scmp.eq.s32.totalorder %s36, 0
      %p78 = por %p76, %p77
      %p79 = scmp.ne.s32.totalorder %s65, %s66
      %p80 = scmp.eq.s32.totalorder %s37, 1
      %p81 = por %p79, %p80
      %p83 = scmp.ne.s32.totalorder %s66, %s82
      %p84 = scmp.eq.s32.totalorder %s37, 0
      %p85 = por %p83, %p84
      %s86 = ssub.s32 %s38, %s57
      %p87 = scmp.eq.s32.totalorder %s86, 0
      %s89 = sadd.s32 %s88, 1
      %s90 = scalar_select %p87, %s88, %s89
      %p93 = pneg %p87
      %p94 = scmp.eq.s32.totalorder %s31, 1
      %p95 = por %p93, %p94
      %p96 = scmp.ne.s32.totalorder %s88, %s91
      %p97 = scmp.eq.s32.totalorder %s31, 0
      %p98 = por %p96, %p97
      %p99 = scmp.ne.s32.totalorder %s88, %s91
      %p100 = scmp.eq.s32.totalorder %s36, 1
      %p101 = por %p99, %p100
      %p102 = scmp.ne.s32.totalorder %s91, %s92
      %p103 = scmp.eq.s32.totalorder %s36, 0
      %p104 = por %p102, %p103
      %p105 = scmp.ne.s32.totalorder %s91, %s92
      %p106 = scmp.eq.s32.totalorder %s37, 1
      %p107 = por %p105, %p106
      %p109 = scmp.ne.s32.totalorder %s92, %s108
      %p110 = scmp.eq.s32.totalorder %s37, 0
      %p111 = por %p109, %p110
      %s112 = ssub.s32 %s38, %s57
      %p113 = scmp.eq.s32.totalorder %s112, 0
      %s115 = sadd.s32 %s114, 1
      %s116 = scalar_select %p113, %s114, %s115
      %p119 = pneg %p113
      %p120 = scmp.eq.s32.totalorder %s31, 1
      %p121 = por %p119, %p120
      %p122 = scmp.ne.s32.totalorder %s114, %s117
      %p123 = scmp.eq.s32.totalorder %s31, 0
      %p124 = por %p122, %p123
      %p125 = scmp.ne.s32.totalorder %s114, %s117
      %p126 = scmp.eq.s32.totalorder %s36, 1
      %p127 = por %p125, %p126
      %p128 = scmp.ne.s32.totalorder %s117, %s118
      %p129 = scmp.eq.s32.totalorder %s36, 0
      %p130 = por %p128, %p129
      %p131 = scmp.ne.s32.totalorder %s117, %s118
      %p132 = scmp.eq.s32.totalorder %s37, 1
      %p133 = por %p131, %p132
      %p135 = scmp.ne.s32.totalorder %s118, %s134
      %p136 = scmp.eq.s32.totalorder %s37, 0
      %p137 = por %p135, %p136
      %s138 = ssub.s32 %s38, %s57
      %s139 = ssub.s32 %s40, %s49
      %s140 = sor.u32 %s138, %s139
      %s141 = ssub.s32 %s39, %s53
      %s142 = sor.u32 %s140, %s141
      %p143 = scmp.eq.s32.totalorder %s142, 0
      %s145 = sadd.s32 %s144, 1
      %s146 = scalar_select %p143, %s144, %s145
      %p149 = pneg %p143
      %p150 = scmp.eq.s32.totalorder %s31, 1
      %p151 = por %p149, %p150
      %p152 = scmp.ne.s32.totalorder %s144, %s147
      %p153 = scmp.eq.s32.totalorder %s31, 0
      %p154 = por %p152, %p153
      %p155 = scmp.ne.s32.totalorder %s144, %s147
      %p156 = scmp.eq.s32.totalorder %s36, 1
      %p157 = por %p155, %p156
      %p158 = scmp.ne.s32.totalorder %s147, %s148
      %p159 = scmp.eq.s32.totalorder %s36, 0
      %p160 = por %p158, %p159
      %p161 = scmp.ne.s32.totalorder %s147, %s148
      %p162 = scmp.eq.s32.totalorder %s37, 1
      %p163 = por %p161, %p162
      %p165 = scmp.ne.s32.totalorder %s148, %s164
      %p166 = scmp.eq.s32.totalorder %s37, 0
      %p167 = por %p165, %p166
      %s168 = ssub.s32 %s40, %s49
      %p169 = scmp.eq.s32.totalorder %s168, 0
      %s171 = sadd.s32 %s170, 1
      %s172 = scalar_select %p169, %s170, %s171
      %p175 = pneg %p169
      %p176 = scmp.eq.s32.totalorder %s31, 1
      %p177 = por %p175, %p176
      %p178 = scmp.ne.s32.totalorder %s170, %s173
      %p179 = scmp.eq.s32.totalorder %s31, 0
      %p180 = por %p178, %p179
      %p181 = scmp.ne.s32.totalorder %s170, %s173
      %p182 = scmp.eq.s32.totalorder %s36, 1
      %p183 = por %p181, %p182
      %p184 = scmp.ne.s32.totalorder %s173, %s174
      %p185 = scmp.eq.s32.totalorder %s36, 0
      %p186 = por %p184, %p185
      %p187 = scmp.ne.s32.totalorder %s173, %s174
      %p188 = scmp.eq.s32.totalorder %s37, 1
      %p189 = por %p187, %p188
      %p191 = scmp.ne.s32.totalorder %s174, %s190
      %p192 = scmp.eq.s32.totalorder %s37, 0
      %p193 = por %p191, %p192
      %s194 = ssub.s32 %s40, %s49
      %p195 = scmp.eq.s32.totalorder %s194, 0
      %s197 = sadd.s32 %s196, 1
      %s198 = scalar_select %p195, %s196, %s197
      %p201 = pneg %p195
      %p202 = scmp.eq.s32.totalorder %s31, 1
      %p203 = por %p201, %p202
      %p204 = scmp.ne.s32.totalorder %s196, %s199
      %p205 = scmp.eq.s32.totalorder %s31, 0
      %p206 = por %p204, %p205
      %p207 = scmp.ne.s32.totalorder %s196, %s199
      %p208 = scmp.eq.s32.totalorder %s36, 1
      %p209 = por %p207, %p208
      %p210 = scmp.ne.s32.totalorder %s199, %s200
      %p211 = scmp.eq.s32.totalorder %s36, 0
      %p212 = por %p210, %p211
      %p213 = scmp.ne.s32.totalorder %s199, %s200
      %p214 = scmp.eq.s32.totalorder %s37, 1
      %p215 = por %p213, %p214
      %p217 = scmp.ne.s32.totalorder %s200, %s216
      %p218 = scmp.eq.s32.totalorder %s37, 0
      %p219 = por %p217, %p218
      %s220 = ssub.s32 %s40, %s49
      %p221 = scmp.eq.s32.totalorder %s220, 0
      %s223 = sadd.s32 %s222, 1
      %s224 = scalar_select %p221, %s222, %s223
      %p227 = pneg %p221
      %p228 = scmp.eq.s32.totalorder %s31, 1
      %p229 = por %p227, %p228
      %p230 = scmp.ne.s32.totalorder %s222, %s225
      %p231 = scmp.eq.s32.totalorder %s31, 0
      %p232 = por %p230, %p231
      %p233 = scmp.ne.s32.totalorder %s222, %s225
      %p234 = scmp.eq.s32.totalorder %s36, 1
      %p235 = por %p233, %p234
      %p236 = scmp.ne.s32.totalorder %s225, %s226
      %p237 = scmp.eq.s32.totalorder %s36, 0
      %p238 = por %p236, %p237
      %p239 = scmp.ne.s32.totalorder %s225, %s226
      %p240 = scmp.eq.s32.totalorder %s37, 1
      %p241 = por %p239, %p240
      %p243 = scmp.ne.s32.totalorder %s226, %s242
      %p244 = scmp.eq.s32.totalorder %s37, 0
      %p245 = por %p243, %p244
      %s246 = ssub.s32 %s40, %s49
      %p247 = scmp.eq.s32.totalorder %s246, 0
      %s249 = sadd.s32 %s248, 1
      %s250 = scalar_select %p247, %s248, %s249
      %p253 = pneg %p247
      %p254 = scmp.eq.s32.totalorder %s31, 1
      %p255 = por %p253, %p254
      %p256 = scmp.ne.s32.totalorder %s248, %s251
      %p257 = scmp.eq.s32.totalorder %s31, 0
      %p258 = por %p256, %p257
      %p259 = scmp.ne.s32.totalorder %s248, %s251
      %p260 = scmp.eq.s32.totalorder %s36, 1
      %p261 = por %p259, %p260
      %p262 = scmp.ne.s32.totalorder %s251, %s252
      %p263 = scmp.eq.s32.totalorder %s36, 0
      %p264 = por %p262, %p263
      %p265 = scmp.ne.s32.totalorder %s251, %s252
      %p266 = scmp.eq.s32.totalorder %s37, 1
      %p267 = por %p265, %p266
      %p269 = scmp.ne.s32.totalorder %s252, %s268
      %p270 = scmp.eq.s32.totalorder %s37, 0
      %p271 = por %p269, %p270
      %s272 = ssub.s32 %s40, %s49
      %p273 = scmp.eq.s32.totalorder %s272, 0
      %s275 = sadd.s32 %s274, 1
      %s276 = scalar_select %p273, %s274, %s275
      %p279 = pneg %p273
      %p280 = scmp.eq.s32.totalorder %s31, 1
      %p281 = por %p279, %p280
      %p282 = scmp.ne.s32.totalorder %s274, %s277
      %p283 = scmp.eq.s32.totalorder %s31, 0
      %p284 = por %p282, %p283
      %p285 = scmp.ne.s32.totalorder %s274, %s277
      %p286 = scmp.eq.s32.totalorder %s36, 1
      %p287 = por %p285, %p286
      %p288 = scmp.ne.s32.totalorder %s277, %s278
      %p289 = scmp.eq.s32.totalorder %s36, 0
      %p290 = por %p288, %p289
      %p291 = scmp.ne.s32.totalorder %s277, %s278
      %p292 = scmp.eq.s32.totalorder %s37, 1
      %p293 = por %p291, %p292
      %p295 = scmp.ne.s32.totalorder %s278, %s294
      %p296 = scmp.eq.s32.totalorder %s37, 0
      %p297 = por %p295, %p296
      %s298 = ssub.s32 %s40, %s49
      %p299 = scmp.eq.s32.totalorder %s298, 0
      %s301 = sadd.s32 %s300, 1
      %s302 = scalar_select %p299, %s300, %s301
      %p305 = pneg %p299
      %p306 = scmp.eq.s32.totalorder %s31, 1
      %p307 = por %p305, %p306
      %p308 = scmp.ne.s32.totalorder %s300, %s303
      %p309 = scmp.eq.s32.totalorder %s31, 0
      %p310 = por %p308, %p309
      %p311 = scmp.ne.s32.totalorder %s300, %s303
      %p312 = scmp.eq.s32.totalorder %s36, 1
      %p313 = por %p311, %p312
      %p314 = scmp.ne.s32.totalorder %s303, %s304
      %p315 = scmp.eq.s32.totalorder %s36, 0
      %p316 = por %p314, %p315
      %p317 = scmp.ne.s32.totalorder %s303, %s304
      %p318 = scmp.eq.s32.totalorder %s37, 1
      %p319 = por %p317, %p318
      %p321 = scmp.ne.s32.totalorder %s304, %s320
      %p322 = scmp.eq.s32.totalorder %s37, 0
      %p323 = por %p321, %p322
      %s325 = sadd.s32 %s324, 1
      %p328 = scmp.eq.s32.totalorder %s31, 1
      %p329 = scmp.ne.s32.totalorder %s324, %s326
      %p330 = scmp.eq.s32.totalorder %s31, 0
      %p331 = por %p329, %p330
      %p332 = scmp.ne.s32.totalorder %s324, %s326
      %p333 = scmp.eq.s32.totalorder %s36, 1
      %p334 = por %p332, %p333
      %p335 = scmp.ne.s32.totalorder %s326, %s327
      %p336 = scmp.eq.s32.totalorder %s36, 0
      %p337 = por %p335, %p336
      %p338 = scmp.ne.s32.totalorder %s326, %s327
      %p339 = scmp.eq.s32.totalorder %s37, 1
      %p340 = por %p338, %p339
      %p342 = scmp.ne.s32.totalorder %s327, %s341
      %p343 = scmp.eq.s32.totalorder %s37, 0
      %p344 = por %p342, %p343
      %s346 = sadd.s32 %s345, 1
      %p349 = scmp.eq.s32.totalorder %s31, 1
      %p350 = scmp.ne.s32.totalorder %s345, %s347
      %p351 = scmp.eq.s32.totalorder %s31, 0
      %p352 = por %p350, %p351
      %p353 = scmp.ne.s32.totalorder %s345, %s347
      %p354 = scmp.eq.s32.totalorder %s36, 1
      %p355 = por %p353, %p354
      %p356 = scmp.ne.s32.totalorder %s347, %s348
      %p357 = scmp.eq.s32.totalorder %s36, 0
      %p358 = por %p356, %p357
      %p359 = scmp.ne.s32.totalorder %s347, %s348
      %p360 = scmp.eq.s32.totalorder %s37, 1
      %p361 = por %p359, %p360
      %p363 = scmp.ne.s32.totalorder %s348, %s362
      %p364 = scmp.eq.s32.totalorder %s37, 0
      %p365 = por %p363, %p364
      %s366 = ssub.s32 %s38, %s57
      %s367 = ssub.s32 %s39, %s53
      %s368 = sor.u32 %s366, %s367
      %p369 = scmp.eq.s32.totalorder %s368, 0
      %s371 = sadd.s32 %s370, 1
      %s372 = scalar_select %p369, %s370, %s371
      %p375 = pneg %p369
      %p376 = scmp.eq.s32.totalorder %s31, 1
      %p377 = por %p375, %p376
      %p378 = scmp.ne.s32.totalorder %s370, %s373
      %p379 = scmp.eq.s32.totalorder %s31, 0
      %p380 = por %p378, %p379
      %p381 = scmp.ne.s32.totalorder %s370, %s373
      %p382 = scmp.eq.s32.totalorder %s36, 1
      %p383 = por %p381, %p382
      %p384 = scmp.ne.s32.totalorder %s373, %s374
      %p385 = scmp.eq.s32.totalorder %s36, 0
      %p386 = por %p384, %p385
      %p387 = scmp.ne.s32.totalorder %s373, %s374
      %p388 = scmp.eq.s32.totalorder %s37, 1
      %p389 = por %p387, %p388
      %p391 = scmp.ne.s32.totalorder %s374, %s390
      %p392 = scmp.eq.s32.totalorder %s37, 0
      %p393 = por %p391, %p392
      %p394 = scmp.le.s32.totalorder 1, %s31
      %p395 = scmp.lt.s32.totalorder %s31, 3
      %p396 = pnand %p394, %p395
      %p397 = pneg %p396
      // Predicated region
      $region9: #{tpu_custom_call.1} parent=5 // pred_check
        _
      $region10: #{tpu_custom_call.1} parent=5 // pred_check_branch
        %399 = sbr.rel (%p396) target = $region12
      $region11: #{tpu_custom_call.1} parent=5 // pred_region
        %s400 = ssub.s32 %s31, 1
        // Predicated region
        $region13: #{tpu_custom_call.1} parent=11 // pred_check
          %p401 = pneg %p186
        $region14: #{tpu_custom_call.1} parent=11 // pred_check_branch
          %403 = sbr.rel (%p401) target = $region16
        $region15: #{tpu_custom_call.1} parent=11 // pred_region
          %s405 = ssub.s32 512, 512
          %406 = vsyncadd [#allocation10], %s405
          %s407 = smul.addr %s43, 128
          %s408 = scalar_lea.hbm %s4, %s407
          %s409 = sshll.u32 [#allocation11], 4
          %s410 = int_to_ptr.vmem [resolvable:$true] %s409
          %415 = dma.hbm_to_vmem [thread:$0]  %s408, 512, %s410, [#allocation10], 128, 128, 8
        $region16: #{tpu_custom_call.1} parent=11 // pred_fallthru
          _
        // Predicated region
        $region17: #{tpu_custom_call.1} parent=11 // pred_check
          %p416 = pneg %p212
        $region18: #{tpu_custom_call.1} parent=11 // pred_check_branch
          %418 = sbr.rel (%p416) target = $region20
        $region19: #{tpu_custom_call.1} parent=11 // pred_region
          %p419 = scmp.lt.s32.totalorder %s43, 0
          %s420 = scalar_select %p419, %s43, 0
          %s421 = scalar_lea.vmem %s5, %s420
        $region20: #{tpu_custom_call.1} parent=11 // pred_fallthru
          _
        // Predicated region
        $region21: #{tpu_custom_call.1} parent=11 // pred_check
          %p422 = pneg %p238
        $region22: #{tpu_custom_call.1} parent=11 // pred_check_branch
          %424 = sbr.rel (%p422) target = $region24
        $region23: #{tpu_custom_call.1} parent=11 // pred_region
          %s426 = ssub.s32 512, 512
          %427 = vsyncadd [#allocation13], %s426
          %s428 = smul.addr %s43, 128
          %s429 = scalar_lea.hbm %s6, %s428
          %s430 = sshll.u32 [#allocation12], 4
          %s431 = int_to_ptr.vmem [resolvable:$true] %s430
          %436 = dma.hbm_to_vmem [thread:$0]  %s429, 512, %s431, [#allocation13], 128, 128, 8
        $region24: #{tpu_custom_call.1} parent=11 // pred_fallthru
          _
        // Predicated region
        $region25: #{tpu_custom_call.1} parent=11 // pred_check
          %p437 = pneg %p264
        $region26: #{tpu_custom_call.1} parent=11 // pred_check_branch
          %439 = sbr.rel (%p437) target = $region28
        $region27: #{tpu_custom_call.1} parent=11 // pred_region
          %p440 = scmp.lt.s32.totalorder %s43, 0
          %s441 = scalar_select %p440, %s43, 0
          %s442 = scalar_lea.vmem %s7, %s441
        $region28: #{tpu_custom_call.1} parent=11 // pred_fallthru
          _
        // Predicated region
        $region29: #{tpu_custom_call.1} parent=11 // pred_check
          %p443 = pneg %p290
        $region30: #{tpu_custom_call.1} parent=11 // pred_check_branch
          %445 = sbr.rel (%p443) target = $region32
        $region31: #{tpu_custom_call.1} parent=11 // pred_region
          %s447 = ssub.s32 512, 512
          %448 = vsyncadd [#allocation13], %s447
          %s449 = smul.addr %s43, 128
          %s450 = scalar_lea.hbm %s8, %s449
          %s451 = sshll.u32 [#allocation14], 4
          %s452 = int_to_ptr.vmem [resolvable:$true] %s451
          %457 = dma.hbm_to_vmem [thread:$0]  %s450, 512, %s452, [#allocation13], 128, 128, 8
        $region32: #{tpu_custom_call.1} parent=11 // pred_fallthru
          _
        // Predicated region
        $region33: #{tpu_custom_call.1} parent=11 // pred_check
          %p458 = pneg %p316
        $region34: #{tpu_custom_call.1} parent=11 // pred_check_branch
          %460 = sbr.rel (%p458) target = $region36
        $region35: #{tpu_custom_call.1} parent=11 // pred_region
          %p461 = scmp.lt.s32.totalorder %s43, 0
          %s462 = scalar_select %p461, %s43, 0
          %s463 = scalar_lea.vmem %s9, %s462
        $region36: #{tpu_custom_call.1} parent=11 // pred_fallthru
          _
        // Predicated region
        $region37: #{tpu_custom_call.1} parent=11 // pred_check
          %p464 = pneg %p337
        $region38: #{tpu_custom_call.1} parent=11 // pred_check_branch
          %466 = sbr.rel (%p464) target = $region40
        $region39: #{tpu_custom_call.1} parent=11 // pred_region
          _
        $region40: #{tpu_custom_call.1} parent=11 // pred_fallthru
          _
        // Predicated region
        $region41: #{tpu_custom_call.1} parent=11 // pred_check
          %p467 = pneg %p358
        $region42: #{tpu_custom_call.1} parent=11 // pred_check_branch
          %469 = sbr.rel (%p467) target = $region44
        $region43: #{tpu_custom_call.1} parent=11 // pred_region
          _
        $region44: #{tpu_custom_call.1} parent=11 // pred_fallthru
          _
      $region12: #{tpu_custom_call.1} parent=5 // pred_fallthru
        _
      %p470 = scmp.lt.s32.totalorder %s31, 2
      // Predicated region
      $region45: #{tpu_custom_call.1} parent=5 // pred_check
        %p471 = pneg %p470
      $region46: #{tpu_custom_call.1} parent=5 // pred_check_branch
        %473 = sbr.rel (%p471) target = $region48
      $region47: #{tpu_custom_call.1} parent=5 // pred_region
        // Predicated region
        $region49: #{tpu_custom_call.1} parent=47 // pred_check
          %p474 = pneg %p72
        $region50: #{tpu_custom_call.1} parent=47 // pred_check_branch
          %476 = sbr.rel (%p474) target = $region52
        $region51: #{tpu_custom_call.1} parent=47 // pred_region
          %s477 = sand.u32 %s62, 1
          %s478 = scalar_lea.sflag [#allocation4], %s477
          %s479 = sand.u32 %s62, 1
          %s480 = smul.addr %s479, 8
          %s481 = scalar_lea.vmem [#allocation3], %s480
          %s483 = ssub.s32 128, 128
          %484 = vsyncadd %s478, %s483
          %s485 = sadd.s32 %s39, %s38
          %s486 = smul.addr %s485, 128
          %s487 = scalar_lea.hbm %s0, %s486
          %s489 = sshll.u32 %s481, 4
          %s490 = int_to_ptr.vmem [resolvable:$true] %s489
          %492 = dma.hbm_to_vmem [thread:$0]  %s487, 128, %s490, %s478
        $region52: #{tpu_custom_call.1} parent=47 // pred_fallthru
          _
        // Predicated region
        $region53: #{tpu_custom_call.1} parent=47 // pred_check
          %p493 = pneg %p98
        $region54: #{tpu_custom_call.1} parent=47 // pred_check_branch
          %495 = sbr.rel (%p493) target = $region56
        $region55: #{tpu_custom_call.1} parent=47 // pred_region
          %s496 = sand.u32 %s31, 1
          %s497 = scalar_lea.sflag [#allocation7], %s496
          %s498 = sand.u32 %s88, 1
          %s499 = smul.addr %s498, 8
          %s500 = scalar_lea.vmem [#allocation6], %s499
          %s502 = ssub.s32 128, 128
          %503 = vsyncadd %s497, %s502
          %s504 = smul.addr %s38, 128
          %s505 = scalar_lea.hbm %s1, %s504
          %s507 = sshll.u32 %s500, 4
          %s508 = int_to_ptr.vmem [resolvable:$true] %s507
          %510 = dma.hbm_to_vmem [thread:$0]  %s505, 128, %s508, %s497
        $region56: #{tpu_custom_call.1} parent=47 // pred_fallthru
          _
        // Predicated region
        $region57: #{tpu_custom_call.1} parent=47 // pred_check
          %p511 = pneg %p124
        $region58: #{tpu_custom_call.1} parent=47 // pred_check_branch
          %513 = sbr.rel (%p511) target = $region60
        $region59: #{tpu_custom_call.1} parent=47 // pred_region
          %s514 = sand.u32 %s31, 1
          %s515 = scalar_lea.sflag [#allocation7], %s514
          %s516 = sand.u32 %s114, 1
          %s517 = smul.addr %s516, 8
          %s518 = scalar_lea.vmem [#allocation8], %s517
          %s520 = ssub.s32 128, 128
          %521 = vsyncadd %s515, %s520
          %s522 = smul.addr %s38, 128
          %s523 = scalar_lea.hbm %s2, %s522
          %s525 = sshll.u32 %s518, 4
          %s526 = int_to_ptr.vmem [resolvable:$true] %s525
          %528 = dma.hbm_to_vmem [thread:$0]  %s523, 128, %s526, %s515
        $region60: #{tpu_custom_call.1} parent=47 // pred_fallthru
          _
        // Predicated region
        $region61: #{tpu_custom_call.1} parent=47 // pred_check
          %p529 = pneg %p154
        $region62: #{tpu_custom_call.1} parent=47 // pred_check_branch
          %531 = sbr.rel (%p529) target = $region64
        $region63: #{tpu_custom_call.1} parent=47 // pred_region
          %s532 = sand.u32 %s31, 1
          %s533 = scalar_lea.sflag [#allocation10], %s532
          %s534 = sand.u32 %s144, 1
          %s535 = smul.addr %s534, 32
          %s536 = scalar_lea.vmem [#allocation9], %s535
          %s537 = smul.u32 4, %s40
          %s539 = ssub.s32 512, 512
          %540 = vsyncadd %s533, %s539
          %s541 = sadd.s32 %s39, %s537
          %s542 = smul.addr %s38, 4
          %s543 = sadd.s32 %s541, %s542
          %s544 = smul.addr %s543, 128
          %s545 = scalar_lea.hbm %s3, %s544
          %s546 = sshll.u32 %s536, 4
          %s547 = int_to_ptr.vmem [resolvable:$true] %s546
          %552 = dma.hbm_to_vmem [thread:$0]  %s545, 512, %s547, %s533, 128, 128, 8
        $region64: #{tpu_custom_call.1} parent=47 // pred_fallthru
          _
      $region48: #{tpu_custom_call.1} parent=5 // pred_fallthru
        _
      %p553 = scmp.le.s32.totalorder 1, %s31
      %p554 = scmp.lt.s32.totalorder %s31, 3
      %p555 = pnand %p553, %p554
      %p556 = pneg %p555
      // Predicated region
      $region65: #{tpu_custom_call.1} parent=5 // pred_check
        _
      $region66: #{tpu_custom_call.1} parent=5 // pred_check_branch
        %558 = sbr.rel (%p555) target = $region68
      $region67: #{tpu_custom_call.1} parent=5 // pred_region
        %s559 = ssub.s32 %s31, 1
        %s560 = sand.u32 %s65, 1
        %s561 = scalar_lea.sflag [#allocation4], %s560
        %s562 = sand.u32 %s65, 1
        %s563 = smul.addr %s562, 8
        %s564 = scalar_lea.vmem [#allocation3], %s563
        // Predicated region
        $region69: #{tpu_custom_call.1} parent=67 // pred_check
          %p565 = pneg %p78
        $region70: #{tpu_custom_call.1} parent=67 // pred_check_branch
          %567 = sbr.rel (%p565) target = $region72
        $region71: #{tpu_custom_call.1} parent=67 // pred_region
          %568 = dma.done %s561, 128
        $region72: #{tpu_custom_call.1} parent=67 // pred_fallthru
          _
        %s569 = sand.u32 %s36, 1
        %s570 = scalar_lea.sflag [#allocation7], %s569
        %s571 = sand.u32 %s91, 1
        %s572 = smul.addr %s571, 8
        %s573 = scalar_lea.vmem [#allocation6], %s572
        // Predicated region
        $region73: #{tpu_custom_call.1} parent=67 // pred_check
          %p574 = pneg %p104
        $region74: #{tpu_custom_call.1} parent=67 // pred_check_branch
          %576 = sbr.rel (%p574) target = $region76
        $region75: #{tpu_custom_call.1} parent=67 // pred_region
          %577 = dma.done %s570, 128
        $region76: #{tpu_custom_call.1} parent=67 // pred_fallthru
          _
        %s578 = sand.u32 %s36, 1
        %s579 = scalar_lea.sflag [#allocation7], %s578
        %s580 = sand.u32 %s117, 1
        %s581 = smul.addr %s580, 8
        %s582 = scalar_lea.vmem [#allocation8], %s581
        // Predicated region
        $region77: #{tpu_custom_call.1} parent=67 // pred_check
          %p583 = pneg %p130
        $region78: #{tpu_custom_call.1} parent=67 // pred_check_branch
          %585 = sbr.rel (%p583) target = $region80
        $region79: #{tpu_custom_call.1} parent=67 // pred_region
          %586 = dma.done %s579, 128
        $region80: #{tpu_custom_call.1} parent=67 // pred_fallthru
          _
        %s587 = sand.u32 %s36, 1
        %s588 = scalar_lea.sflag [#allocation10], %s587
        %s589 = sand.u32 %s147, 1
        %s590 = smul.addr %s589, 32
        %s591 = scalar_lea.vmem [#allocation9], %s590
        // Predicated region
        $region81: #{tpu_custom_call.1} parent=67 // pred_check
          %p592 = pneg %p160
        $region82: #{tpu_custom_call.1} parent=67 // pred_check_branch
          %594 = sbr.rel (%p592) target = $region84
        $region83: #{tpu_custom_call.1} parent=67 // pred_region
          %595 = dma.done %s588, 512
        $region84: #{tpu_custom_call.1} parent=67 // pred_fallthru
          _
        // Predicated region
        $region85: #{tpu_custom_call.1} parent=67 // pred_check
          %p596 = pneg %p186
        $region86: #{tpu_custom_call.1} parent=67 // pred_check_branch
          %598 = sbr.rel (%p596) target = $region88
        $region87: #{tpu_custom_call.1} parent=67 // pred_region
          %599 = dma.done [#allocation10], 512
        $region88: #{tpu_custom_call.1} parent=67 // pred_fallthru
          _
        // Predicated region
        $region89: #{tpu_custom_call.1} parent=67 // pred_check
          %p600 = pneg %p238
        $region90: #{tpu_custom_call.1} parent=67 // pred_check_branch
          %602 = sbr.rel (%p600) target = $region92
        $region91: #{tpu_custom_call.1} parent=67 // pred_region
          %603 = dma.done [#allocation13], 512
        $region92: #{tpu_custom_call.1} parent=67 // pred_fallthru
          _
        // Predicated region
        $region93: #{tpu_custom_call.1} parent=67 // pred_check
          %p604 = pneg %p290
        $region94: #{tpu_custom_call.1} parent=67 // pred_check_branch
          %606 = sbr.rel (%p604) target = $region96
        $region95: #{tpu_custom_call.1} parent=67 // pred_region
          %607 = dma.done [#allocation13], 512
        $region96: #{tpu_custom_call.1} parent=67 // pred_fallthru
          _
        %s608 = sand.u32 %s65, 1
        %s609 = scalar_lea.sflag [#allocation4], %s608
        %s610 = sand.u32 %s65, 1
        %s611 = smul.addr %s610, 8
        %s612 = scalar_lea.vmem [#allocation3], %s611
        %p613 = pneg %p78
        %p614 = pneg %p75
        %s615 = sand.u32 %s36, 1
        %s616 = scalar_lea.sflag [#allocation7], %s615
        %s617 = sand.u32 %s91, 1
        %s618 = smul.addr %s617, 8
        %s619 = scalar_lea.vmem [#allocation6], %s618
        %p620 = pneg %p104
        %p621 = pneg %p101
        %s622 = sand.u32 %s36, 1
        %s623 = scalar_lea.sflag [#allocation7], %s622
        %s624 = sand.u32 %s117, 1
        %s625 = smul.addr %s624, 8
        %s626 = scalar_lea.vmem [#allocation8], %s625
        %p627 = pneg %p130
        %p628 = pneg %p127
        %s629 = sand.u32 %s36, 1
        %s630 = scalar_lea.sflag [#allocation10], %s629
        %s631 = sand.u32 %s147, 1
        %s632 = smul.addr %s631, 32
        %s633 = scalar_lea.vmem [#allocation9], %s632
        %p634 = pneg %p160
        %p635 = pneg %p157
        %p636 = pneg %p186
        %p637 = pneg %p183
        %p638 = scmp.lt.s32.totalorder %s43, 0
        %s639 = scalar_select %p638, %s43, 0
        %s640 = scalar_lea.vmem %s5, %s639
        %p641 = pneg %p212
        %p642 = pneg %p209
        %p643 = pneg %p238
        %p644 = pneg %p235
        %p645 = scmp.lt.s32.totalorder %s43, 0
        %s646 = scalar_select %p645, %s43, 0
        %s647 = scalar_lea.vmem %s7, %s646
        %p648 = pneg %p264
        %p649 = pneg %p261
        %p650 = pneg %p290
        %p651 = pneg %p287
        %p652 = scmp.lt.s32.totalorder %s43, 0
        %s653 = scalar_select %p652, %s43, 0
        %s654 = scalar_lea.vmem %s9, %s653
        %p655 = pneg %p316
        %p656 = pneg %p313
        %p657 = pneg %p337
        %p658 = pneg %p334
        %p659 = pneg %p358
        %p660 = pneg %p355
        %p661 = pneg %p386
        %p662 = pneg %p383
        %s663 = sand.u32 %s373, 1
        %s664 = scalar_lea.sflag [#allocation5], %s663
        %s665 = sand.u32 %s373, 1
        %s666 = smul.addr %s665, 8
        %s667 = scalar_lea.vmem [#allocation15], %s666
        %s668 = smul.u32 4, %s43
        %p669 = scmp.lt.s32.totalorder %s43, 0
        %s670 = scalar_select %p669, %s43, 0
        %s671 = scalar_lea.vmem %s5, %s670
        %p672 = scmp.lt.s32.totalorder %s43, 0
        %s673 = scalar_select %p672, %s43, 0
        %s674 = scalar_lea.vmem %s7, %s673
        %p675 = scmp.lt.s32.totalorder %s43, 0
        %s676 = scalar_select %p675, %s43, 0
        %s677 = scalar_lea.vmem %s9, %s676
        %v678 = vld [vmem:[%s564] sm:$0xff]
        %v679 = vld [vmem:[%s573] sm:$0xff]
        %v680 = vld [vmem:[%s582] sm:$0xff]
        %v681 = vld [vmem:[#allocation11] sm:$0xff]
        %v682 = vld [vmem:[#allocation11 + $0x8] sm:$0xff]
        %v683 = vld [vmem:[#allocation11 + $0x10] sm:$0xff]
        %v684 = vld [vmem:[#allocation11 + $0x18] sm:$0xff]
        %v685 = vld [vmem:[%s671] sm:$0x1]
        %v687 = vlaneseq
        %v688 = vshrl.u32 %v687, 7
        %v689 = vsub.s32 0, %v688
        %v690 = vrot.slane %v685, %v689
        %vm692 = vcmask 261120
        %v694 = vsel %vm692, %v678, 0
        %696 = vmatprep.subr.mxu0 0.0
        %697 = vmatpush1.msra.mxu0 %v681
        %698 = vmatprep.subr.mxu0 0.0
        %699 = vmatpush1.msra.mxu0 %v682
        %700 = vmatprep.subr.mxu0 0.0
        %701 = vmatpush1.msra.mxu0 %v683
        %702 = vmatprep.subr.mxu0 0.0
        %703 = vmatpush1.msra.mxu0 %v684
        %704 = vmatprep.subr.mxu0 0.0
        %705 = vmatpush1.msra.mxu0 0.0
        %706 = vmatprep.subr.mxu0 0.0
        %707 = vmatpush1.msra.mxu0 0.0
        %708 = vmatprep.subr.mxu0 0.0
        %709 = vmatpush1.msra.mxu0 0.0
        %710 = vmatprep.subr.mxu0 0.0
        %711 = vmatpush1.msra.mxu0 0.0
        %712 = vmatprep.subr.mxu0 0.0
        %713 = vmatpush1.msra.mxu0 0.0
        %714 = vmatprep.subr.mxu0 0.0
        %715 = vmatpush1.msra.mxu0 0.0
        %716 = vmatprep.subr.mxu0 0.0
        %717 = vmatpush1.msra.mxu0 0.0
        %718 = vmatprep.subr.mxu0 0.0
        %719 = vmatpush1.msra.mxu0 0.0
        %720 = vmatprep.subr.mxu0 0.0
        %721 = vmatpush1.msra.mxu0 0.0
        %722 = vmatprep.subr.mxu0 0.0
        %723 = vmatpush1.msra.mxu0 0.0
        %724 = vmatprep.subr.mxu0 0.0
        %725 = vmatpush1.msra.mxu0 0.0
        %726 = vmatprep.subr.mxu0 0.0
        %727 = vmatpush1.msra.mxu0 0.0
        %728 = vmatprep.subr.mxu0 0.0
        %729 = vmatpush1.msra.mxu0 0.0
        %730 = vmatprep.subr.mxu0 0.0
        %731 = vmatpush1.msra.mxu0 0.0
        %732 = vmatprep.subr.mxu0 0.0
        %733 = vmatpush1.msra.mxu0 0.0
        %734 = vmatprep.subr.mxu0 0.0
        %735 = vmatpush1.msra.mxu0 0.0
        %736 = vmatprep.subr.mxu0 0.0
        %737 = vmatpush1.msra.mxu0 0.0
        %738 = vmatprep.subr.mxu0 0.0
        %739 = vmatpush1.msra.mxu0 0.0
        %740 = vmatprep.subr.mxu0 0.0
        %741 = vmatpush1.msra.mxu0 0.0
        %742 = vmatprep.subr.mxu0 0.0
        %743 = vmatpush1.msra.mxu0 0.0
        %744 = vmatprep.subr.mxu0 0.0
        %745 = vmatpush1.msra.mxu0 0.0
        %746 = vmatprep.subr.mxu0 0.0
        %747 = vmatpush1.msra.mxu0 0.0
        %748 = vmatprep.subr.mxu0 0.0
        %749 = vmatpush1.msra.mxu0 0.0
        %750 = vmatprep.subr.mxu0 0.0
        %751 = vmatpush1.msra.mxu0 0.0
        %752 = vmatprep.subr.mxu0 0.0
        %753 = vmatpush1.msra.mxu0 0.0
        %754 = vmatprep.subr.mxu0 0.0
        %755 = vmatpush1.msra.mxu0 0.0
        %756 = vmatprep.subr.mxu0 0.0
        %757 = vmatpush1.msra.mxu0 0.0
        %758 = vmatprep.subr.mxu0 0.0
        %759 = vmatpush1.msra.mxu0 0.0
        %760 = vmatprep.mubr.f32.mxu0 0.0
        %761 = vmatmul.mubr.f32.gmra.mrb[0].mxu0 %v694
        %v762 = vpop.f32.mrb[0].mxu0
        %v763 = vadd.f32 %v690, %v762
        %v764 = vpop.f32.mrb[0].mxu0
        %765 = vdwg.mxu0
        %v766 = vld [vmem:[#allocation12] sm:$0xff]
        %v767 = vld [vmem:[#allocation12 + $0x8] sm:$0xff]
        %v768 = vld [vmem:[#allocation12 + $0x10] sm:$0xff]
        %v769 = vld [vmem:[#allocation12 + $0x18] sm:$0xff]
        %v770 = vld [vmem:[%s674] sm:$0x1]
        %v772 = vlaneseq
        %v773 = vshrl.u32 %v772, 7
        %v774 = vsub.s32 0, %v773
        %v775 = vrot.slane %v770, %v774
        %v778 = vsel %vm692, %v679, 0
        %780 = vmatprep.subr.mxu0 0.0
        %781 = vmatpush1.msra.mxu0 %v766
        %782 = vmatprep.subr.mxu0 0.0
        %783 = vmatpush1.msra.mxu0 %v767
        %784 = vmatprep.subr.mxu0 0.0
        %785 = vmatpush1.msra.mxu0 %v768
        %786 = vmatprep.subr.mxu0 0.0
        %787 = vmatpush1.msra.mxu0 %v769
        %788 = vmatprep.subr.mxu0 0.0
        %789 = vmatpush1.msra.mxu0 0.0
        %790 = vmatprep.subr.mxu0 0.0
        %791 = vmatpush1.msra.mxu0 0.0
        %792 = vmatprep.subr.mxu0 0.0
        %793 = vmatpush1.msra.mxu0 0.0
        %794 = vmatprep.subr.mxu0 0.0
        %795 = vmatpush1.msra.mxu0 0.0
        %796 = vmatprep.subr.mxu0 0.0
        %797 = vmatpush1.msra.mxu0 0.0
        %798 = vmatprep.subr.mxu0 0.0
        %799 = vmatpush1.msra.mxu0 0.0
        %800 = vmatprep.subr.mxu0 0.0
        %801 = vmatpush1.msra.mxu0 0.0
        %802 = vmatprep.subr.mxu0 0.0
        %803 = vmatpush1.msra.mxu0 0.0
        %804 = vmatprep.subr.mxu0 0.0
        %805 = vmatpush1.msra.mxu0 0.0
        %806 = vmatprep.subr.mxu0 0.0
        %807 = vmatpush1.msra.mxu0 0.0
        %808 = vmatprep.subr.mxu0 0.0
        %809 = vmatpush1.msra.mxu0 0.0
        %810 = vmatprep.subr.mxu0 0.0
        %811 = vmatpush1.msra.mxu0 0.0
        %812 = vmatprep.subr.mxu0 0.0
        %813 = vmatpush1.msra.mxu0 0.0
        %814 = vmatprep.subr.mxu0 0.0
        %815 = vmatpush1.msra.mxu0 0.0
        %816 = vmatprep.subr.mxu0 0.0
        %817 = vmatpush1.msra.mxu0 0.0
        %818 = vmatprep.subr.mxu0 0.0
        %819 = vmatpush1.msra.mxu0 0.0
        %820 = vmatprep.subr.mxu0 0.0
        %821 = vmatpush1.msra.mxu0 0.0
        %822 = vmatprep.subr.mxu0 0.0
        %823 = vmatpush1.msra.mxu0 0.0
        %824 = vmatprep.subr.mxu0 0.0
        %825 = vmatpush1.msra.mxu0 0.0
        %826 = vmatprep.subr.mxu0 0.0
        %827 = vmatpush1.msra.mxu0 0.0
        %828 = vmatprep.subr.mxu0 0.0
        %829 = vmatpush1.msra.mxu0 0.0
        %830 = vmatprep.subr.mxu0 0.0
        %831 = vmatpush1.msra.mxu0 0.0
        %832 = vmatprep.subr.mxu0 0.0
        %833 = vmatpush1.msra.mxu0 0.0
        %834 = vmatprep.subr.mxu0 0.0
        %835 = vmatpush1.msra.mxu0 0.0
        %836 = vmatprep.subr.mxu0 0.0
        %837 = vmatpush1.msra.mxu0 0.0
        %838 = vmatprep.subr.mxu0 0.0
        %839 = vmatpush1.msra.mxu0 0.0
        %840 = vmatprep.subr.mxu0 0.0
        %841 = vmatpush1.msra.mxu0 0.0
        %842 = vmatprep.subr.mxu0 0.0
        %843 = vmatpush1.msra.mxu0 0.0
        %844 = vmatprep.mubr.f32.mxu0 0.0
        %845 = vmatmul.mubr.f32.gmra.mrb[0].mxu0 %v778
        %v846 = vpop.f32.mrb[0].mxu0
        %v847 = vadd.f32 %v775, %v846
        %v848 = vpop.f32.mrb[0].mxu0
        %849 = vdwg.mxu0
        %v850 = vld [vmem:[#allocation14] sm:$0xff]
        %v851 = vld [vmem:[#allocation14 + $0x8] sm:$0xff]
        %v852 = vld [vmem:[#allocation14 + $0x10] sm:$0xff]
        %v853 = vld [vmem:[#allocation14 + $0x18] sm:$0xff]
        %v854 = vld [vmem:[%s677] sm:$0x1]
        %v856 = vlaneseq
        %v857 = vshrl.u32 %v856, 7
        %v858 = vsub.s32 0, %v857
        %v859 = vrot.slane %v854, %v858
        %v862 = vsel %vm692, %v680, 0
        %864 = vmatprep.subr.mxu0 0.0
        %865 = vmatpush1.msra.mxu0 %v850
        %866 = vmatprep.subr.mxu0 0.0
        %867 = vmatpush1.msra.mxu0 %v851
        %868 = vmatprep.subr.mxu0 0.0
        %869 = vmatpush1.msra.mxu0 %v852
        %870 = vmatprep.subr.mxu0 0.0
        %871 = vmatpush1.msra.mxu0 %v853
        %872 = vmatprep.subr.mxu0 0.0
        %873 = vmatpush1.msra.mxu0 0.0
        %874 = vmatprep.subr.mxu0 0.0
        %875 = vmatpush1.msra.mxu0 0.0
        %876 = vmatprep.subr.mxu0 0.0
        %877 = vmatpush1.msra.mxu0 0.0
        %878 = vmatprep.subr.mxu0 0.0
        %879 = vmatpush1.msra.mxu0 0.0
        %880 = vmatprep.subr.mxu0 0.0
        %881 = vmatpush1.msra.mxu0 0.0
        %882 = vmatprep.subr.mxu0 0.0
        %883 = vmatpush1.msra.mxu0 0.0
        %884 = vmatprep.subr.mxu0 0.0
        %885 = vmatpush1.msra.mxu0 0.0
        %886 = vmatprep.subr.mxu0 0.0
        %887 = vmatpush1.msra.mxu0 0.0
        %888 = vmatprep.subr.mxu0 0.0
        %889 = vmatpush1.msra.mxu0 0.0
        %890 = vmatprep.subr.mxu0 0.0
        %891 = vmatpush1.msra.mxu0 0.0
        %892 = vmatprep.subr.mxu0 0.0
        %893 = vmatpush1.msra.mxu0 0.0
        %894 = vmatprep.subr.mxu0 0.0
        %895 = vmatpush1.msra.mxu0 0.0
        %896 = vmatprep.subr.mxu0 0.0
        %897 = vmatpush1.msra.mxu0 0.0
        %898 = vmatprep.subr.mxu0 0.0
        %899 = vmatpush1.msra.mxu0 0.0
        %900 = vmatprep.subr.mxu0 0.0
        %901 = vmatpush1.msra.mxu0 0.0
        %902 = vmatprep.subr.mxu0 0.0
        %903 = vmatpush1.msra.mxu0 0.0
        %904 = vmatprep.subr.mxu0 0.0
        %905 = vmatpush1.msra.mxu0 0.0
        %906 = vmatprep.subr.mxu0 0.0
        %907 = vmatpush1.msra.mxu0 0.0
        %908 = vmatprep.subr.mxu0 0.0
        %909 = vmatpush1.msra.mxu0 0.0
        %910 = vmatprep.subr.mxu0 0.0
        %911 = vmatpush1.msra.mxu0 0.0
        %912 = vmatprep.subr.mxu0 0.0
        %913 = vmatpush1.msra.mxu0 0.0
        %914 = vmatprep.subr.mxu0 0.0
        %915 = vmatpush1.msra.mxu0 0.0
        %916 = vmatprep.subr.mxu0 0.0
        %917 = vmatpush1.msra.mxu0 0.0
        %918 = vmatprep.subr.mxu0 0.0
        %919 = vmatpush1.msra.mxu0 0.0
        %920 = vmatprep.subr.mxu0 0.0
        %921 = vmatpush1.msra.mxu0 0.0
        %922 = vmatprep.subr.mxu0 0.0
        %923 = vmatpush1.msra.mxu0 0.0
        %924 = vmatprep.subr.mxu0 0.0
        %925 = vmatpush1.msra.mxu0 0.0
        %926 = vmatprep.subr.mxu0 0.0
        %927 = vmatpush1.msra.mxu0 0.0
        %928 = vmatprep.mubr.f32.mxu0 0.0
        %929 = vmatmul.mubr.f32.gmra.mrb[0].mxu0 %v862
        %v930 = vpop.f32.mrb[0].mxu0
        %v931 = vadd.f32 %v859, %v930
        %v932 = vpop.f32.mrb[0].mxu0
        %933 = vdwg.mxu0
        %v934 = vmul.f32 %v763, 0.35355338
        %v935 = vld [vmem:[%s591] sm:$0xff]
        %vm936 = vcmask 64512
        %v938 = vsel %vm936, %v934, 0
        %v941 = vsel %vm936, %v847, 0
        %943 = vmatprep.subr.mxu0 0.0
        %944 = vmatpush1.xpose.msra.mxu0 %v941
        %945 = vmatprep.subr.mxu0 0.0
        %946 = vmatpush1.xpose.msra.mxu0 0.0
        %947 = vmatprep.subr.mxu0 0.0
        %948 = vmatpush1.xpose.msra.mxu0 0.0
        %949 = vmatprep.subr.mxu0 0.0
        %950 = vmatpush1.xpose.msra.mxu0 0.0
        %951 = vmatprep.subr.mxu0 0.0
        %952 = vmatpush1.xpose.msra.mxu0 0.0
        %953 = vmatprep.subr.mxu0 0.0
        %954 = vmatpush1.xpose.msra.mxu0 0.0
        %955 = vmatprep.subr.mxu0 0.0
        %956 = vmatpush1.xpose.msra.mxu0 0.0
        %957 = vmatprep.subr.mxu0 0.0
        %958 = vmatpush1.xpose.msra.mxu0 0.0
        %959 = vmatprep.subr.mxu0 0.0
        %960 = vmatpush1.xpose.msra.mxu0 0.0
        %961 = vmatprep.subr.mxu0 0.0
        %962 = vmatpush1.xpose.msra.mxu0 0.0
        %963 = vmatprep.subr.mxu0 0.0
        %964 = vmatpush1.xpose.msra.mxu0 0.0
        %965 = vmatprep.subr.mxu0 0.0
        %966 = vmatpush1.xpose.msra.mxu0 0.0
        %967 = vmatprep.subr.mxu0 0.0
        %968 = vmatpush1.xpose.msra.mxu0 0.0
        %969 = vmatprep.subr.mxu0 0.0
        %970 = vmatpush1.xpose.msra.mxu0 0.0
        %971 = vmatprep.subr.mxu0 0.0
        %972 = vmatpush1.xpose.msra.mxu0 0.0
        %973 = vmatprep.subr.mxu0 0.0
        %974 = vmatpush1.xpose.msra.mxu0 0.0
        %975 = vmatprep.subr.mxu0 0.0
        %976 = vmatpush1.xpose.msra.mxu0 0.0
        %977 = vmatprep.subr.mxu0 0.0
        %978 = vmatpush1.xpose.msra.mxu0 0.0
        %979 = vmatprep.subr.mxu0 0.0
        %980 = vmatpush1.xpose.msra.mxu0 0.0
        %981 = vmatprep.subr.mxu0 0.0
        %982 = vmatpush1.xpose.msra.mxu0 0.0
        %983 = vmatprep.subr.mxu0 0.0
        %984 = vmatpush1.xpose.msra.mxu0 0.0
        %985 = vmatprep.subr.mxu0 0.0
        %986 = vmatpush1.xpose.msra.mxu0 0.0
        %987 = vmatprep.subr.mxu0 0.0
        %988 = vmatpush1.xpose.msra.mxu0 0.0
        %989 = vmatprep.subr.mxu0 0.0
        %990 = vmatpush1.xpose.msra.mxu0 0.0
        %991 = vmatprep.subr.mxu0 0.0
        %992 = vmatpush1.xpose.msra.mxu0 0.0
        %993 = vmatprep.subr.mxu0 0.0
        %994 = vmatpush1.xpose.msra.mxu0 0.0
        %995 = vmatprep.subr.mxu0 0.0
        %996 = vmatpush1.xpose.msra.mxu0 0.0
        %997 = vmatprep.subr.mxu0 0.0
        %998 = vmatpush1.xpose.msra.mxu0 0.0
        %999 = vmatprep.subr.mxu0 0.0
        %1000 = vmatpush1.xpose.msra.mxu0 0.0
        %1001 = vmatprep.subr.mxu0 0.0
        %1002 = vmatpush1.xpose.msra.mxu0 0.0
        %1003 = vmatprep.subr.mxu0 0.0
        %1004 = vmatpush1.xpose.msra.mxu0 0.0
        %1005 = vmatprep.subr.mxu0 0.0
        %1006 = vmatpush1.xpose.msra.mxu0 0.0
        %1007 = vmatprep.mubr.f32.mxu0 0.0
        %1008 = vmatmul.mubr.f32.gmra.mrb[0].mxu0 %v938
        %v1009 = vpop.f32.mrb[0].mxu0
        %v1010 = vadd.f32 %v935, %v1009
        %v1011 = vpop.f32.mrb[0].mxu0
        %1012 = vdwg.mxu0
        %v1013 = vsel %vm936, %v1010, -inf
        %1014 = vmax.xlane.f32.xlu0 %v1013
        %v1015 = vpop.xlane.xlu0 %1014
        %v1016 = vsub.f32 %v1010, %v1015
        %v1017 = vmul.f32 %v1016, 1.442695
        %v1018 = vpow.pop %v1017
        %v1019 = vsel %vm936, %v1018, 0.0
        %1020 = vadd.xlane.f32.xlu0 %v1019
        %v1021 = vpop.xlane.xlu0 %1020
        %v1023 = vsel %vm936, %v1018, 0
        %1025 = vmatprep.subr.mxu0 0.0
        %1026 = vmatpush1.msra.mxu0 %v931
        %1027 = vmatprep.subr.mxu0 0.0
        %1028 = vmatpush1.msra.mxu0 0.0
        %1029 = vmatprep.subr.mxu0 0.0
        %1030 = vmatpush1.msra.mxu0 0.0
        %1031 = vmatprep.subr.mxu0 0.0
        %1032 = vmatpush1.msra.mxu0 0.0
        %1033 = vmatprep.subr.mxu0 0.0
        %1034 = vmatpush1.msra.mxu0 0.0
        %1035 = vmatprep.subr.mxu0 0.0
        %1036 = vmatpush1.msra.mxu0 0.0
        %1037 = vmatprep.subr.mxu0 0.0
        %1038 = vmatpush1.msra.mxu0 0.0
        %1039 = vmatprep.subr.mxu0 0.0
        %1040 = vmatpush1.msra.mxu0 0.0
        %1041 = vmatprep.subr.mxu0 0.0
        %1042 = vmatpush1.msra.mxu0 0.0
        %1043 = vmatprep.subr.mxu0 0.0
        %1044 = vmatpush1.msra.mxu0 0.0
        %1045 = vmatprep.subr.mxu0 0.0
        %1046 = vmatpush1.msra.mxu0 0.0
        %1047 = vmatprep.subr.mxu0 0.0
        %1048 = vmatpush1.msra.mxu0 0.0
        %1049 = vmatprep.subr.mxu0 0.0
        %1050 = vmatpush1.msra.mxu0 0.0
        %1051 = vmatprep.subr.mxu0 0.0
        %1052 = vmatpush1.msra.mxu0 0.0
        %1053 = vmatprep.subr.mxu0 0.0
        %1054 = vmatpush1.msra.mxu0 0.0
        %1055 = vmatprep.subr.mxu0 0.0
        %1056 = vmatpush1.msra.mxu0 0.0
        %1057 = vmatprep.subr.mxu0 0.0
        %1058 = vmatpush1.msra.mxu0 0.0
        %1059 = vmatprep.subr.mxu0 0.0
        %1060 = vmatpush1.msra.mxu0 0.0
        %1061 = vmatprep.subr.mxu0 0.0
        %1062 = vmatpush1.msra.mxu0 0.0
        %1063 = vmatprep.subr.mxu0 0.0
        %1064 = vmatpush1.msra.mxu0 0.0
        %1065 = vmatprep.subr.mxu0 0.0
        %1066 = vmatpush1.msra.mxu0 0.0
        %1067 = vmatprep.subr.mxu0 0.0
        %1068 = vmatpush1.msra.mxu0 0.0
        %1069 = vmatprep.subr.mxu0 0.0
        %1070 = vmatpush1.msra.mxu0 0.0
        %1071 = vmatprep.subr.mxu0 0.0
        %1072 = vmatpush1.msra.mxu0 0.0
        %1073 = vmatprep.subr.mxu0 0.0
        %1074 = vmatpush1.msra.mxu0 0.0
        %1075 = vmatprep.subr.mxu0 0.0
        %1076 = vmatpush1.msra.mxu0 0.0
        %1077 = vmatprep.subr.mxu0 0.0
        %1078 = vmatpush1.msra.mxu0 0.0
        %1079 = vmatprep.subr.mxu0 0.0
        %1080 = vmatpush1.msra.mxu0 0.0
        %1081 = vmatprep.subr.mxu0 0.0
        %1082 = vmatpush1.msra.mxu0 0.0
        %1083 = vmatprep.subr.mxu0 0.0
        %1084 = vmatpush1.msra.mxu0 0.0
        %1085 = vmatprep.subr.mxu0 0.0
        %1086 = vmatpush1.msra.mxu0 0.0
        %1087 = vmatprep.subr.mxu0 0.0
        %1088 = vmatpush1.msra.mxu0 0.0
        %1089 = vmatprep.mubr.f32.mxu0 0.0
        %1090 = vmatmul.mubr.f32.gmra.mrb[0].mxu0 %v1023
        %v1091 = vpop.f32.mrb[0].mxu0
        %v1092 = vadd.f32 0.0, %v1091
        %v1093 = vpop.f32.mrb[0].mxu0
        %1094 = vdwg.mxu0
        %v1095 = vrcp.pop %v1021
        %v1096 = vmul.f32 %v1092, %v1095
        %s1097 = scalar_lea.vmem %s591, 8 [#allocation9]
        %v1098 = vld [vmem:[%s1097] sm:$0xff]
        %1099 = vrot.lane.b32.xlu0 %v934, 120
        %v1100 = vpop.permute.xlu0 %1099
        %1101 = vrot.lane.b32.xlu0 %v847, 120
        %v1102 = vpop.permute.xlu0 %1101
        %v1103 = vsel %vm936, %v1100, 0
        %v1105 = vsel %vm936, %v1102, 0
        %1107 = vmatprep.subr.mxu0 0.0
        %1108 = vmatpush1.xpose.msra.mxu0 %v1105
        %1109 = vmatprep.subr.mxu0 0.0
        %1110 = vmatpush1.xpose.msra.mxu0 0.0
        %1111 = vmatprep.subr.mxu0 0.0
        %1112 = vmatpush1.xpose.msra.mxu0 0.0
        %1113 = vmatprep.subr.mxu0 0.0
        %1114 = vmatpush1.xpose.msra.mxu0 0.0
        %1115 = vmatprep.subr.mxu0 0.0
        %1116 = vmatpush1.xpose.msra.mxu0 0.0
        %1117 = vmatprep.subr.mxu0 0.0
        %1118 = vmatpush1.xpose.msra.mxu0 0.0
        %1119 = vmatprep.subr.mxu0 0.0
        %1120 = vmatpush1.xpose.msra.mxu0 0.0
        %1121 = vmatprep.subr.mxu0 0.0
        %1122 = vmatpush1.xpose.msra.mxu0 0.0
        %1123 = vmatprep.subr.mxu0 0.0
        %1124 = vmatpush1.xpose.msra.mxu0 0.0
        %1125 = vmatprep.subr.mxu0 0.0
        %1126 = vmatpush1.xpose.msra.mxu0 0.0
        %1127 = vmatprep.subr.mxu0 0.0
        %1128 = vmatpush1.xpose.msra.mxu0 0.0
        %1129 = vmatprep.subr.mxu0 0.0
        %1130 = vmatpush1.xpose.msra.mxu0 0.0
        %1131 = vmatprep.subr.mxu0 0.0
        %1132 = vmatpush1.xpose.msra.mxu0 0.0
        %1133 = vmatprep.subr.mxu0 0.0
        %1134 = vmatpush1.xpose.msra.mxu0 0.0
        %1135 = vmatprep.subr.mxu0 0.0
        %1136 = vmatpush1.xpose.msra.mxu0 0.0
        %1137 = vmatprep.subr.mxu0 0.0
        %1138 = vmatpush1.xpose.msra.mxu0 0.0
        %1139 = vmatprep.subr.mxu0 0.0
        %1140 = vmatpush1.xpose.msra.mxu0 0.0
        %1141 = vmatprep.subr.mxu0 0.0
        %1142 = vmatpush1.xpose.msra.mxu0 0.0
        %1143 = vmatprep.subr.mxu0 0.0
        %1144 = vmatpush1.xpose.msra.mxu0 0.0
        %1145 = vmatprep.subr.mxu0 0.0
        %1146 = vmatpush1.xpose.msra.mxu0 0.0
        %1147 = vmatprep.subr.mxu0 0.0
        %1148 = vmatpush1.xpose.msra.mxu0 0.0
        %1149 = vmatprep.subr.mxu0 0.0
        %1150 = vmatpush1.xpose.msra.mxu0 0.0
        %1151 = vmatprep.subr.mxu0 0.0
        %1152 = vmatpush1.xpose.msra.mxu0 0.0
        %1153 = vmatprep.subr.mxu0 0.0
        %1154 = vmatpush1.xpose.msra.mxu0 0.0
        %1155 = vmatprep.subr.mxu0 0.0
        %1156 = vmatpush1.xpose.msra.mxu0 0.0
        %1157 = vmatprep.subr.mxu0 0.0
        %1158 = vmatpush1.xpose.msra.mxu0 0.0
        %1159 = vmatprep.subr.mxu0 0.0
        %1160 = vmatpush1.xpose.msra.mxu0 0.0
        %1161 = vmatprep.subr.mxu0 0.0
        %1162 = vmatpush1.xpose.msra.mxu0 0.0
        %1163 = vmatprep.subr.mxu0 0.0
        %1164 = vmatpush1.xpose.msra.mxu0 0.0
        %1165 = vmatprep.subr.mxu0 0.0
        %1166 = vmatpush1.xpose.msra.mxu0 0.0
        %1167 = vmatprep.subr.mxu0 0.0
        %1168 = vmatpush1.xpose.msra.mxu0 0.0
        %1169 = vmatprep.subr.mxu0 0.0
        %1170 = vmatpush1.xpose.msra.mxu0 0.0
        %1171 = vmatprep.mubr.f32.mxu0 0.0
        %1172 = vmatmul.mubr.f32.gmra.mrb[0].mxu0 %v1103
        %v1173 = vpop.f32.mrb[0].mxu0
        %v1174 = vadd.f32 %v1098, %v1173
        %v1175 = vpop.f32.mrb[0].mxu0
        %1176 = vdwg.mxu0
        %v1177 = vsel %vm936, %v1174, -inf
        %1178 = vmax.xlane.f32.xlu0 %v1177
        %v1179 = vpop.xlane.xlu0 %1178
        %v1180 = vsub.f32 %v1174, %v1179
        %v1181 = vmul.f32 %v1180, 1.442695
        %v1182 = vpow.pop %v1181
        %v1183 = vsel %vm936, %v1182, 0.0
        %1184 = vadd.xlane.f32.xlu0 %v1183
        %v1185 = vpop.xlane.xlu0 %1184
        %1187 = vrot.lane.b32.xlu0 %v931, 120
        %v1188 = vpop.permute.xlu0 %1187
        %v1191 = vsel %vm936, %v1182, 0
        %1193 = vmatprep.subr.mxu0 0.0
        %1194 = vmatpush1.msra.mxu0 %v1188
        %1195 = vmatprep.subr.mxu0 0.0
        %1196 = vmatpush1.msra.mxu0 0.0
        %1197 = vmatprep.subr.mxu0 0.0
        %1198 = vmatpush1.msra.mxu0 0.0
        %1199 = vmatprep.subr.mxu0 0.0
        %1200 = vmatpush1.msra.mxu0 0.0
        %1201 = vmatprep.subr.mxu0 0.0
        %1202 = vmatpush1.msra.mxu0 0.0
        %1203 = vmatprep.subr.mxu0 0.0
        %1204 = vmatpush1.msra.mxu0 0.0
        %1205 = vmatprep.subr.mxu0 0.0
        %1206 = vmatpush1.msra.mxu0 0.0
        %1207 = vmatprep.subr.mxu0 0.0
        %1208 = vmatpush1.msra.mxu0 0.0
        %1209 = vmatprep.subr.mxu0 0.0
        %1210 = vmatpush1.msra.mxu0 0.0
        %1211 = vmatprep.subr.mxu0 0.0
        %1212 = vmatpush1.msra.mxu0 0.0
        %1213 = vmatprep.subr.mxu0 0.0
        %1214 = vmatpush1.msra.mxu0 0.0
        %1215 = vmatprep.subr.mxu0 0.0
        %1216 = vmatpush1.msra.mxu0 0.0
        %1217 = vmatprep.subr.mxu0 0.0
        %1218 = vmatpush1.msra.mxu0 0.0
        %1219 = vmatprep.subr.mxu0 0.0
        %1220 = vmatpush1.msra.mxu0 0.0
        %1221 = vmatprep.subr.mxu0 0.0
        %1222 = vmatpush1.msra.mxu0 0.0
        %1223 = vmatprep.subr.mxu0 0.0
        %1224 = vmatpush1.msra.mxu0 0.0
        %1225 = vmatprep.subr.mxu0 0.0
        %1226 = vmatpush1.msra.mxu0 0.0
        %1227 = vmatprep.subr.mxu0 0.0
        %1228 = vmatpush1.msra.mxu0 0.0
        %1229 = vmatprep.subr.mxu0 0.0
        %1230 = vmatpush1.msra.mxu0 0.0
        %1231 = vmatprep.subr.mxu0 0.0
        %1232 = vmatpush1.msra.mxu0 0.0
        %1233 = vmatprep.subr.mxu0 0.0
        %1234 = vmatpush1.msra.mxu0 0.0
        %1235 = vmatprep.subr.mxu0 0.0
        %1236 = vmatpush1.msra.mxu0 0.0
        %1237 = vmatprep.subr.mxu0 0.0
        %1238 = vmatpush1.msra.mxu0 0.0
        %1239 = vmatprep.subr.mxu0 0.0
        %1240 = vmatpush1.msra.mxu0 0.0
        %1241 = vmatprep.subr.mxu0 0.0
        %1242 = vmatpush1.msra.mxu0 0.0
        %1243 = vmatprep.subr.mxu0 0.0
        %1244 = vmatpush1.msra.mxu0 0.0
        %1245 = vmatprep.subr.mxu0 0.0
        %1246 = vmatpush1.msra.mxu0 0.0
        %1247 = vmatprep.subr.mxu0 0.0
        %1248 = vmatpush1.msra.mxu0 0.0
        %1249 = vmatprep.subr.mxu0 0.0
        %1250 = vmatpush1.msra.mxu0 0.0
        %1251 = vmatprep.subr.mxu0 0.0
        %1252 = vmatpush1.msra.mxu0 0.0
        %1253 = vmatprep.subr.mxu0 0.0
        %1254 = vmatpush1.msra.mxu0 0.0
        %1255 = vmatprep.subr.mxu0 0.0
        %1256 = vmatpush1.msra.mxu0 0.0
        %1257 = vmatprep.mubr.f32.mxu0 0.0
        %1258 = vmatmul.mubr.f32.gmra.mrb[0].mxu0 %v1191
        %v1259 = vpop.f32.mrb[0].mxu0
        %v1260 = vadd.f32 0.0, %v1259
        %v1261 = vpop.f32.mrb[0].mxu0
        %1262 = vdwg.mxu0
        %v1263 = vrcp.pop %v1185
        %v1264 = vmul.f32 %v1260, %v1263
        %s1265 = scalar_lea.vmem %s591, 16 [#allocation9]
        %v1266 = vld [vmem:[%s1265] sm:$0xff]
        %1267 = vrot.lane.b32.xlu0 %v934, 112
        %v1268 = vpop.permute.xlu0 %1267
        %1269 = vrot.lane.b32.xlu0 %v847, 112
        %v1270 = vpop.permute.xlu0 %1269
        %v1271 = vsel %vm936, %v1268, 0
        %v1273 = vsel %vm936, %v1270, 0
        %1275 = vmatprep.subr.mxu0 0.0
        %1276 = vmatpush1.xpose.msra.mxu0 %v1273
        %1277 = vmatprep.subr.mxu0 0.0
        %1278 = vmatpush1.xpose.msra.mxu0 0.0
        %1279 = vmatprep.subr.mxu0 0.0
        %1280 = vmatpush1.xpose.msra.mxu0 0.0
        %1281 = vmatprep.subr.mxu0 0.0
        %1282 = vmatpush1.xpose.msra.mxu0 0.0
        %1283 = vmatprep.subr.mxu0 0.0
        %1284 = vmatpush1.xpose.msra.mxu0 0.0
        %1285 = vmatprep.subr.mxu0 0.0
        %1286 = vmatpush1.xpose.msra.mxu0 0.0
        %1287 = vmatprep.subr.mxu0 0.0
        %1288 = vmatpush1.xpose.msra.mxu0 0.0
        %1289 = vmatprep.subr.mxu0 0.0
        %1290 = vmatpush1.xpose.msra.mxu0 0.0
        %1291 = vmatprep.subr.mxu0 0.0
        %1292 = vmatpush1.xpose.msra.mxu0 0.0
        %1293 = vmatprep.subr.mxu0 0.0
        %1294 = vmatpush1.xpose.msra.mxu0 0.0
        %1295 = vmatprep.subr.mxu0 0.0
        %1296 = vmatpush1.xpose.msra.mxu0 0.0
        %1297 = vmatprep.subr.mxu0 0.0
        %1298 = vmatpush1.xpose.msra.mxu0 0.0
        %1299 = vmatprep.subr.mxu0 0.0
        %1300 = vmatpush1.xpose.msra.mxu0 0.0
        %1301 = vmatprep.subr.mxu0 0.0
        %1302 = vmatpush1.xpose.msra.mxu0 0.0
        %1303 = vmatprep.subr.mxu0 0.0
        %1304 = vmatpush1.xpose.msra.mxu0 0.0
        %1305 = vmatprep.subr.mxu0 0.0
        %1306 = vmatpush1.xpose.msra.mxu0 0.0
        %1307 = vmatprep.subr.mxu0 0.0
        %1308 = vmatpush1.xpose.msra.mxu0 0.0
        %1309 = vmatprep.subr.mxu0 0.0
        %1310 = vmatpush1.xpose.msra.mxu0 0.0
        %1311 = vmatprep.subr.mxu0 0.0
        %1312 = vmatpush1.xpose.msra.mxu0 0.0
        %1313 = vmatprep.subr.mxu0 0.0
        %1314 = vmatpush1.xpose.msra.mxu0 0.0
        %1315 = vmatprep.subr.mxu0 0.0
        %1316 = vmatpush1.xpose.msra.mxu0 0.0
        %1317 = vmatprep.subr.mxu0 0.0
        %1318 = vmatpush1.xpose.msra.mxu0 0.0
        %1319 = vmatprep.subr.mxu0 0.0
        %1320 = vmatpush1.xpose.msra.mxu0 0.0
        %1321 = vmatprep.subr.mxu0 0.0
        %1322 = vmatpush1.xpose.msra.mxu0 0.0
        %1323 = vmatprep.subr.mxu0 0.0
        %1324 = vmatpush1.xpose.msra.mxu0 0.0
        %1325 = vmatprep.subr.mxu0 0.0
        %1326 = vmatpush1.xpose.msra.mxu0 0.0
        %1327 = vmatprep.subr.mxu0 0.0
        %1328 = vmatpush1.xpose.msra.mxu0 0.0
        %1329 = vmatprep.subr.mxu0 0.0
        %1330 = vmatpush1.xpose.msra.mxu0 0.0
        %1331 = vmatprep.subr.mxu0 0.0
        %1332 = vmatpush1.xpose.msra.mxu0 0.0
        %1333 = vmatprep.subr.mxu0 0.0
        %1334 = vmatpush1.xpose.msra.mxu0 0.0
        %1335 = vmatprep.subr.mxu0 0.0
        %1336 = vmatpush1.xpose.msra.mxu0 0.0
        %1337 = vmatprep.subr.mxu0 0.0
        %1338 = vmatpush1.xpose.msra.mxu0 0.0
        %1339 = vmatprep.mubr.f32.mxu0 0.0
        %1340 = vmatmul.mubr.f32.gmra.mrb[0].mxu0 %v1271
        %v1341 = vpop.f32.mrb[0].mxu0
        %v1342 = vadd.f32 %v1266, %v1341
        %v1343 = vpop.f32.mrb[0].mxu0
        %1344 = vdwg.mxu0
        %v1345 = vsel %vm936, %v1342, -inf
        %1346 = vmax.xlane.f32.xlu0 %v1345
        %v1347 = vpop.xlane.xlu0 %1346
        %v1348 = vsub.f32 %v1342, %v1347
        %v1349 = vmul.f32 %v1348, 1.442695
        %v1350 = vpow.pop %v1349
        %v1351 = vsel %vm936, %v1350, 0.0
        %1352 = vadd.xlane.f32.xlu0 %v1351
        %v1353 = vpop.xlane.xlu0 %1352
        %1354 = vrot.lane.b32.xlu0 %v931, 112
        %v1355 = vpop.permute.xlu0 %1354
        %v1358 = vsel %vm936, %v1350, 0
        %1360 = vmatprep.subr.mxu0 0.0
        %1361 = vmatpush1.msra.mxu0 %v1355
        %1362 = vmatprep.subr.mxu0 0.0
        %1363 = vmatpush1.msra.mxu0 0.0
        %1364 = vmatprep.subr.mxu0 0.0
        %1365 = vmatpush1.msra.mxu0 0.0
        %1366 = vmatprep.subr.mxu0 0.0
        %1367 = vmatpush1.msra.mxu0 0.0
        %1368 = vmatprep.subr.mxu0 0.0
        %1369 = vmatpush1.msra.mxu0 0.0
        %1370 = vmatprep.subr.mxu0 0.0
        %1371 = vmatpush1.msra.mxu0 0.0
        %1372 = vmatprep.subr.mxu0 0.0
        %1373 = vmatpush1.msra.mxu0 0.0
        %1374 = vmatprep.subr.mxu0 0.0
        %1375 = vmatpush1.msra.mxu0 0.0
        %1376 = vmatprep.subr.mxu0 0.0
        %1377 = vmatpush1.msra.mxu0 0.0
        %1378 = vmatprep.subr.mxu0 0.0
        %1379 = vmatpush1.msra.mxu0 0.0
        %1380 = vmatprep.subr.mxu0 0.0
        %1381 = vmatpush1.msra.mxu0 0.0
        %1382 = vmatprep.subr.mxu0 0.0
        %1383 = vmatpush1.msra.mxu0 0.0
        %1384 = vmatprep.subr.mxu0 0.0
        %1385 = vmatpush1.msra.mxu0 0.0
        %1386 = vmatprep.subr.mxu0 0.0
        %1387 = vmatpush1.msra.mxu0 0.0
        %1388 = vmatprep.subr.mxu0 0.0
        %1389 = vmatpush1.msra.mxu0 0.0
        %1390 = vmatprep.subr.mxu0 0.0
        %1391 = vmatpush1.msra.mxu0 0.0
        %1392 = vmatprep.subr.mxu0 0.0
        %1393 = vmatpush1.msra.mxu0 0.0
        %1394 = vmatprep.subr.mxu0 0.0
        %1395 = vmatpush1.msra.mxu0 0.0
        %1396 = vmatprep.subr.mxu0 0.0
        %1397 = vmatpush1.msra.mxu0 0.0
        %1398 = vmatprep.subr.mxu0 0.0
        %1399 = vmatpush1.msra.mxu0 0.0
        %1400 = vmatprep.subr.mxu0 0.0
        %1401 = vmatpush1.msra.mxu0 0.0
        %1402 = vmatprep.subr.mxu0 0.0
        %1403 = vmatpush1.msra.mxu0 0.0
        %1404 = vmatprep.subr.mxu0 0.0
        %1405 = vmatpush1.msra.mxu0 0.0
        %1406 = vmatprep.subr.mxu0 0.0
        %1407 = vmatpush1.msra.mxu0 0.0
        %1408 = vmatprep.subr.mxu0 0.0
        %1409 = vmatpush1.msra.mxu0 0.0
        %1410 = vmatprep.subr.mxu0 0.0
        %1411 = vmatpush1.msra.mxu0 0.0
        %1412 = vmatprep.subr.mxu0 0.0
        %1413 = vmatpush1.msra.mxu0 0.0
        %1414 = vmatprep.subr.mxu0 0.0
        %1415 = vmatpush1.msra.mxu0 0.0
        %1416 = vmatprep.subr.mxu0 0.0
        %1417 = vmatpush1.msra.mxu0 0.0
        %1418 = vmatprep.subr.mxu0 0.0
        %1419 = vmatpush1.msra.mxu0 0.0
        %1420 = vmatprep.subr.mxu0 0.0
        %1421 = vmatpush1.msra.mxu0 0.0
        %1422 = vmatprep.subr.mxu0 0.0
        %1423 = vmatpush1.msra.mxu0 0.0
        %1424 = vmatprep.mubr.f32.mxu0 0.0
        %1425 = vmatmul.mubr.f32.gmra.mrb[0].mxu0 %v1358
        %v1426 = vpop.f32.mrb[0].mxu0
        %v1427 = vadd.f32 0.0, %v1426
        %v1428 = vpop.f32.mrb[0].mxu0
        %1429 = vdwg.mxu0
        %v1430 = vrcp.pop %v1353
        %v1431 = vmul.f32 %v1427, %v1430
        %s1432 = scalar_lea.vmem %s591, 24 [#allocation9]
        %v1433 = vld [vmem:[%s1432] sm:$0xff]
        %1434 = vrot.lane.b32.xlu0 %v934, 104
        %v1435 = vpop.permute.xlu0 %1434
        %1436 = vrot.lane.b32.xlu0 %v847, 104
        %v1437 = vpop.permute.xlu0 %1436
        %v1438 = vsel %vm936, %v1435, 0
        %v1440 = vsel %vm936, %v1437, 0
        %1442 = vmatprep.subr.mxu0 0.0
        %1443 = vmatpush1.xpose.msra.mxu0 %v1440
        %1444 = vmatprep.subr.mxu0 0.0
        %1445 = vmatpush1.xpose.msra.mxu0 0.0
        %1446 = vmatprep.subr.mxu0 0.0
        %1447 = vmatpush1.xpose.msra.mxu0 0.0
        %1448 = vmatprep.subr.mxu0 0.0
        %1449 = vmatpush1.xpose.msra.mxu0 0.0
        %1450 = vmatprep.subr.mxu0 0.0
        %1451 = vmatpush1.xpose.msra.mxu0 0.0
        %1452 = vmatprep.subr.mxu0 0.0
        %1453 = vmatpush1.xpose.msra.mxu0 0.0
        %1454 = vmatprep.subr.mxu0 0.0
        %1455 = vmatpush1.xpose.msra.mxu0 0.0
        %1456 = vmatprep.subr.mxu0 0.0
        %1457 = vmatpush1.xpose.msra.mxu0 0.0
        %1458 = vmatprep.subr.mxu0 0.0
        %1459 = vmatpush1.xpose.msra.mxu0 0.0
        %1460 = vmatprep.subr.mxu0 0.0
        %1461 = vmatpush1.xpose.msra.mxu0 0.0
        %1462 = vmatprep.subr.mxu0 0.0
        %1463 = vmatpush1.xpose.msra.mxu0 0.0
        %1464 = vmatprep.subr.mxu0 0.0
        %1465 = vmatpush1.xpose.msra.mxu0 0.0
        %1466 = vmatprep.subr.mxu0 0.0
        %1467 = vmatpush1.xpose.msra.mxu0 0.0
        %1468 = vmatprep.subr.mxu0 0.0
        %1469 = vmatpush1.xpose.msra.mxu0 0.0
        %1470 = vmatprep.subr.mxu0 0.0
        %1471 = vmatpush1.xpose.msra.mxu0 0.0
        %1472 = vmatprep.subr.mxu0 0.0
        %1473 = vmatpush1.xpose.msra.mxu0 0.0
        %1474 = vmatprep.subr.mxu0 0.0
        %1475 = vmatpush1.xpose.msra.mxu0 0.0
        %1476 = vmatprep.subr.mxu0 0.0
        %1477 = vmatpush1.xpose.msra.mxu0 0.0
        %1478 = vmatprep.subr.mxu0 0.0
        %1479 = vmatpush1.xpose.msra.mxu0 0.0
        %1480 = vmatprep.subr.mxu0 0.0
        %1481 = vmatpush1.xpose.msra.mxu0 0.0
        %1482 = vmatprep.subr.mxu0 0.0
        %1483 = vmatpush1.xpose.msra.mxu0 0.0
        %1484 = vmatprep.subr.mxu0 0.0
        %1485 = vmatpush1.xpose.msra.mxu0 0.0
        %1486 = vmatprep.subr.mxu0 0.0
        %1487 = vmatpush1.xpose.msra.mxu0 0.0
        %1488 = vmatprep.subr.mxu0 0.0
        %1489 = vmatpush1.xpose.msra.mxu0 0.0
        %1490 = vmatprep.subr.mxu0 0.0
        %1491 = vmatpush1.xpose.msra.mxu0 0.0
        %1492 = vmatprep.subr.mxu0 0.0
        %1493 = vmatpush1.xpose.msra.mxu0 0.0
        %1494 = vmatprep.subr.mxu0 0.0
        %1495 = vmatpush1.xpose.msra.mxu0 0.0
        %1496 = vmatprep.subr.mxu0 0.0
        %1497 = vmatpush1.xpose.msra.mxu0 0.0
        %1498 = vmatprep.subr.mxu0 0.0
        %1499 = vmatpush1.xpose.msra.mxu0 0.0
        %1500 = vmatprep.subr.mxu0 0.0
        %1501 = vmatpush1.xpose.msra.mxu0 0.0
        %1502 = vmatprep.subr.mxu0 0.0
        %1503 = vmatpush1.xpose.msra.mxu0 0.0
        %1504 = vmatprep.subr.mxu0 0.0
        %1505 = vmatpush1.xpose.msra.mxu0 0.0
        %1506 = vmatprep.mubr.f32.mxu0 0.0
        %1507 = vmatmul.mubr.f32.gmra.mrb[0].mxu0 %v1438
        %v1508 = vpop.f32.mrb[0].mxu0
        %v1509 = vadd.f32 %v1433, %v1508
        %v1510 = vpop.f32.mrb[0].mxu0
        %1511 = vdwg.mxu0
        %v1512 = vsel %vm936, %v1509, -inf
        %1513 = vmax.xlane.f32.xlu0 %v1512
        %v1514 = vpop.xlane.xlu0 %1513
        %v1515 = vsub.f32 %v1509, %v1514
        %v1516 = vmul.f32 %v1515, 1.442695
        %v1517 = vpow.pop %v1516
        %v1518 = vsel %vm936, %v1517, 0.0
        %1519 = vadd.xlane.f32.xlu0 %v1518
        %v1520 = vpop.xlane.xlu0 %1519
        %1521 = vrot.lane.b32.xlu0 %v931, 104
        %v1522 = vpop.permute.xlu0 %1521
        %v1525 = vsel %vm936, %v1517, 0
        %1527 = vmatprep.subr.mxu0 0.0
        %1528 = vmatpush1.msra.mxu0 %v1522
        %1529 = vmatprep.subr.mxu0 0.0
        %1530 = vmatpush1.msra.mxu0 0.0
        %1531 = vmatprep.subr.mxu0 0.0
        %1532 = vmatpush1.msra.mxu0 0.0
        %1533 = vmatprep.subr.mxu0 0.0
        %1534 = vmatpush1.msra.mxu0 0.0
        %1535 = vmatprep.subr.mxu0 0.0
        %1536 = vmatpush1.msra.mxu0 0.0
        %1537 = vmatprep.subr.mxu0 0.0
        %1538 = vmatpush1.msra.mxu0 0.0
        %1539 = vmatprep.subr.mxu0 0.0
        %1540 = vmatpush1.msra.mxu0 0.0
        %1541 = vmatprep.subr.mxu0 0.0
        %1542 = vmatpush1.msra.mxu0 0.0
        %1543 = vmatprep.subr.mxu0 0.0
        %1544 = vmatpush1.msra.mxu0 0.0
        %1545 = vmatprep.subr.mxu0 0.0
        %1546 = vmatpush1.msra.mxu0 0.0
        %1547 = vmatprep.subr.mxu0 0.0
        %1548 = vmatpush1.msra.mxu0 0.0
        %1549 = vmatprep.subr.mxu0 0.0
        %1550 = vmatpush1.msra.mxu0 0.0
        %1551 = vmatprep.subr.mxu0 0.0
        %1552 = vmatpush1.msra.mxu0 0.0
        %1553 = vmatprep.subr.mxu0 0.0
        %1554 = vmatpush1.msra.mxu0 0.0
        %1555 = vmatprep.subr.mxu0 0.0
        %1556 = vmatpush1.msra.mxu0 0.0
        %1557 = vmatprep.subr.mxu0 0.0
        %1558 = vmatpush1.msra.mxu0 0.0
        %1559 = vmatprep.subr.mxu0 0.0
        %1560 = vmatpush1.msra.mxu0 0.0
        %1561 = vmatprep.subr.mxu0 0.0
        %1562 = vmatpush1.msra.mxu0 0.0
        %1563 = vmatprep.subr.mxu0 0.0
        %1564 = vmatpush1.msra.mxu0 0.0
        %1565 = vmatprep.subr.mxu0 0.0
        %1566 = vmatpush1.msra.mxu0 0.0
        %1567 = vmatprep.subr.mxu0 0.0
        %1568 = vmatpush1.msra.mxu0 0.0
        %1569 = vmatprep.subr.mxu0 0.0
        %1570 = vmatpush1.msra.mxu0 0.0
        %1571 = vmatprep.subr.mxu0 0.0
        %1572 = vmatpush1.msra.mxu0 0.0
        %1573 = vmatprep.subr.mxu0 0.0
        %1574 = vmatpush1.msra.mxu0 0.0
        %1575 = vmatprep.subr.mxu0 0.0
        %1576 = vmatpush1.msra.mxu0 0.0
        %1577 = vmatprep.subr.mxu0 0.0
        %1578 = vmatpush1.msra.mxu0 0.0
        %1579 = vmatprep.subr.mxu0 0.0
        %1580 = vmatpush1.msra.mxu0 0.0
        %1581 = vmatprep.subr.mxu0 0.0
        %1582 = vmatpush1.msra.mxu0 0.0
        %1583 = vmatprep.subr.mxu0 0.0
        %1584 = vmatpush1.msra.mxu0 0.0
        %1585 = vmatprep.subr.mxu0 0.0
        %1586 = vmatpush1.msra.mxu0 0.0
        %1587 = vmatprep.subr.mxu0 0.0
        %1588 = vmatpush1.msra.mxu0 0.0
        %1589 = vmatprep.subr.mxu0 0.0
        %1590 = vmatpush1.msra.mxu0 0.0
        %1591 = vmatprep.mubr.f32.mxu0 0.0
        %1592 = vmatmul.mubr.f32.gmra.mrb[0].mxu0 %v1525
        %v1593 = vpop.f32.mrb[0].mxu0
        %v1594 = vadd.f32 0.0, %v1593
        %v1595 = vpop.f32.mrb[0].mxu0
        %1596 = vdwg.mxu0
        %v1597 = vrcp.pop %v1520
        %v1598 = vmul.f32 %v1594, %v1597
        %1600 = vrot.lane.b32.xlu0 %v1264, 8
        %v1601 = vpop.permute.xlu0 %1600
        %1604 = vrot.lane.b32.xlu0 %v1431, 16
        %v1605 = vpop.permute.xlu0 %1604
        %1608 = vrot.lane.b32.xlu0 %v1598, 24
        %v1609 = vpop.permute.xlu0 %1608
        %v1611 = vsel %vm936, %v1096, %v1601
        %vm1612 = vcmask 130048
        %v1613 = vsel %vm1612, %v1611, %v1605
        %vm1614 = vcmask 195584
        %v1615 = vsel %vm1614, %v1613, %v1609
        %1616 = vst.msk [vmem:[#allocation2] sm:$0xff] %vm692, %v1615
        %p1617 = scmp.eq.s32.totalorder %s43, 0
        // Predicated region
        $region97: #{tpu_custom_call.1} parent=67 // pred_check
          %p1618 = pneg %p1617
        $region98: #{tpu_custom_call.1} parent=67 // pred_check_branch
          %1620 = sbr.rel (%p1618) target = $region100
        $region99: #{tpu_custom_call.1} parent=67 // pred_region
          %v1621 = vld [vmem:[#allocation2] sm:$0xff]
          %v1622 = vld [vmem:[%s10] sm:$0xff]
          %v1623 = vld [vmem:[%s10 + $0x8] sm:$0xff]
          %v1624 = vld [vmem:[%s10 + $0x10] sm:$0xff]
          %v1625 = vld [vmem:[%s10 + $0x18] sm:$0xff]
          %v1626 = vld [vmem:[%s11] sm:$0x1]
          %v1628 = vlaneseq
          %v1629 = vshrl.u32 %v1628, 7
          %v1630 = vsub.s32 0, %v1629
          %v1631 = vrot.slane %v1626, %v1630
          %v1634 = vsel %vm692, %v1621, 0
          %1636 = vmatprep.subr.mxu0 0.0
          %1637 = vmatpush1.msra.mxu0 %v1622
          %1638 = vmatprep.subr.mxu0 0.0
          %1639 = vmatpush1.msra.mxu0 %v1623
          %1640 = vmatprep.subr.mxu0 0.0
          %1641 = vmatpush1.msra.mxu0 %v1624
          %1642 = vmatprep.subr.mxu0 0.0
          %1643 = vmatpush1.msra.mxu0 %v1625
          %1644 = vmatprep.subr.mxu0 0.0
          %1645 = vmatpush1.msra.mxu0 0.0
          %1646 = vmatprep.subr.mxu0 0.0
          %1647 = vmatpush1.msra.mxu0 0.0
          %1648 = vmatprep.subr.mxu0 0.0
          %1649 = vmatpush1.msra.mxu0 0.0
          %1650 = vmatprep.subr.mxu0 0.0
          %1651 = vmatpush1.msra.mxu0 0.0
          %1652 = vmatprep.subr.mxu0 0.0
          %1653 = vmatpush1.msra.mxu0 0.0
          %1654 = vmatprep.subr.mxu0 0.0
          %1655 = vmatpush1.msra.mxu0 0.0
          %1656 = vmatprep.subr.mxu0 0.0
          %1657 = vmatpush1.msra.mxu0 0.0
          %1658 = vmatprep.subr.mxu0 0.0
          %1659 = vmatpush1.msra.mxu0 0.0
          %1660 = vmatprep.subr.mxu0 0.0
          %1661 = vmatpush1.msra.mxu0 0.0
          %1662 = vmatprep.subr.mxu0 0.0
          %1663 = vmatpush1.msra.mxu0 0.0
          %1664 = vmatprep.subr.mxu0 0.0
          %1665 = vmatpush1.msra.mxu0 0.0
          %1666 = vmatprep.subr.mxu0 0.0
          %1667 = vmatpush1.msra.mxu0 0.0
          %1668 = vmatprep.subr.mxu0 0.0
          %1669 = vmatpush1.msra.mxu0 0.0
          %1670 = vmatprep.subr.mxu0 0.0
          %1671 = vmatpush1.msra.mxu0 0.0
          %1672 = vmatprep.subr.mxu0 0.0
          %1673 = vmatpush1.msra.mxu0 0.0
          %1674 = vmatprep.subr.mxu0 0.0
          %1675 = vmatpush1.msra.mxu0 0.0
          %1676 = vmatprep.subr.mxu0 0.0
          %1677 = vmatpush1.msra.mxu0 0.0
          %1678 = vmatprep.subr.mxu0 0.0
          %1679 = vmatpush1.msra.mxu0 0.0
          %1680 = vmatprep.subr.mxu0 0.0
          %1681 = vmatpush1.msra.mxu0 0.0
          %1682 = vmatprep.subr.mxu0 0.0
          %1683 = vmatpush1.msra.mxu0 0.0
          %1684 = vmatprep.subr.mxu0 0.0
          %1685 = vmatpush1.msra.mxu0 0.0
          %1686 = vmatprep.subr.mxu0 0.0
          %1687 = vmatpush1.msra.mxu0 0.0
          %1688 = vmatprep.subr.mxu0 0.0
          %1689 = vmatpush1.msra.mxu0 0.0
          %1690 = vmatprep.subr.mxu0 0.0
          %1691 = vmatpush1.msra.mxu0 0.0
          %1692 = vmatprep.subr.mxu0 0.0
          %1693 = vmatpush1.msra.mxu0 0.0
          %1694 = vmatprep.subr.mxu0 0.0
          %1695 = vmatpush1.msra.mxu0 0.0
          %1696 = vmatprep.subr.mxu0 0.0
          %1697 = vmatpush1.msra.mxu0 0.0
          %1698 = vmatprep.subr.mxu0 0.0
          %1699 = vmatpush1.msra.mxu0 0.0
          %1700 = vmatprep.mubr.f32.mxu0 0.0
          %1701 = vmatmul.mubr.f32.gmra.mrb[0].mxu0 %v1634
          %v1702 = vpop.f32.mrb[0].mxu0
          %v1703 = vadd.f32 %v1631, %v1702
          %v1704 = vpop.f32.mrb[0].mxu0
          %1705 = vdwg.mxu0
          %1706 = vst.msk [vmem:[%s667] sm:$0xff] %vm692, %v1703
        $region100: #{tpu_custom_call.1} parent=67 // pred_fallthru
          _
        %s1707 = sand.u32 %s373, 1
        %s1708 = scalar_lea.sflag [#allocation5], %s1707
        %s1709 = sand.u32 %s373, 1
        %s1710 = smul.addr %s1709, 8
        %s1711 = scalar_lea.vmem [#allocation15], %s1710
        // Predicated region
        $region101: #{tpu_custom_call.1} parent=67 // pred_check
          %p1712 = pneg %p383
        $region102: #{tpu_custom_call.1} parent=67 // pred_check_branch
          %1714 = sbr.rel (%p1712) target = $region104
        $region103: #{tpu_custom_call.1} parent=67 // pred_region
          %s1716 = ssub.s32 128, 128
          %1717 = vsyncadd %s1708, %s1716
          %s1718 = sadd.s32 %s42, %s41
          %s1719 = smul.addr %s1718, 128
          %s1720 = scalar_lea.hbm %s12, %s1719
          %s1722 = sshll.u32 %s1711, 4
          %s1723 = int_to_ptr.vmem [resolvable:$true] %s1722
          %1725 = dma.vmem_to_hbm [thread:$0]  %s1723, 128, %s1720, %s1708
        $region104: #{tpu_custom_call.1} parent=67 // pred_fallthru
          _
      $region68: #{tpu_custom_call.1} parent=5 // pred_fallthru
        _
      %p1726 = scmp.le.s32.totalorder 2, %s31
      // Predicated region
      $region105: #{tpu_custom_call.1} parent=5 // pred_check
        %p1727 = pneg %p1726
      $region106: #{tpu_custom_call.1} parent=5 // pred_check_branch
        %1729 = sbr.rel (%p1727) target = $region108
      $region107: #{tpu_custom_call.1} parent=5 // pred_region
        %s1730 = ssub.s32 %s31, 2
        // Predicated region
        $region109: #{tpu_custom_call.1} parent=107 // pred_check
          %p1731 = pneg %p389
        $region110: #{tpu_custom_call.1} parent=107 // pred_check_branch
          %1733 = sbr.rel (%p1731) target = $region112
        $region111: #{tpu_custom_call.1} parent=107 // pred_region
          %s1734 = sand.u32 %s374, 1
          %s1735 = scalar_lea.sflag [#allocation5], %s1734
          %s1736 = sand.u32 %s374, 1
          %s1737 = smul.addr %s1736, 8
          %s1738 = scalar_lea.vmem [#allocation15], %s1737
          %1739 = dma.done %s1735, 128
        $region112: #{tpu_custom_call.1} parent=107 // pred_fallthru
          _
      $region108: #{tpu_custom_call.1} parent=5 // pred_fallthru
        _
    $region6: #{tpu_custom_call.1} parent=1 // loop_footer
      %s35 = sadd.s32 1, %s31
    $region7: #{tpu_custom_call.1} parent=1 // loop_footer_branch
      %30 = sbr.rel target = $region3
    $region8: #{tpu_custom_call.1} parent=1 // loop_exit
      _
    %1740 = vsyncpa [#allocation4], 1
    %s1741 = scalar_lea.sflag [#allocation4], 1
    %1742 = vsyncpa %s1741, 1
    %1743 = vsyncpa [#allocation7], 1
    %s1744 = scalar_lea.sflag [#allocation7], 1
    %1745 = vsyncpa %s1744, 1
    %1746 = vsyncpa [#allocation10], 1
    %s1747 = scalar_lea.sflag [#allocation10], 1
    %1748 = vsyncpa %s1747, 1
    %1749 = vsyncpa [#allocation13], 1
    %1750 = vsyncpa [#allocation5], 1
    %s1751 = scalar_lea.sflag [#allocation5], 1
    %1752 = vsyncpa %s1751, 1

</llo_original>
